<compile_context>
chip_gen: v5e
topology: v5e:2x2
jax: 0.10.0
libtpu: 0.0.40
codegen_flags: <defaults>
</compile_context>

<pallas_src>
import functools

import jax
import jax.numpy as jnp
from jax.experimental import pallas as pl
from jax.experimental.pallas import tpu as pltpu


def _round_up(x, m):
    return (x + m - 1) // m * m


# ----------------------------------------------------------------------------
# Generic tiled linear kernel:  y = x @ W + b   (W is (K, N), bf16 on the MXU)
# ----------------------------------------------------------------------------
def _linear_kernel(x_ref, w_ref, b_ref, o_ref):
    o_ref[...] = (
        jnp.dot(x_ref[...], w_ref[...], preferred_element_type=jnp.float32)
        + b_ref[...]
    )


def pallas_linear(x, w, b, *, tile_m=256):
    """x: (M, K), w: (K, N), b: (N,) -> (M, N) f32.  M is tiled across the grid."""
    M, K = x.shape
    N = w.shape[1]
    Mp = _round_up(max(M, 8), 8)
    tm = min(tile_m, Mp)
    Mp = _round_up(Mp, tm)
    xp = x if Mp == M else jnp.pad(x, ((0, Mp - M), (0, 0)))
    vmem = int(min(64 << 20, max(16 << 20, 8 * (tm * K + K * N + tm * N))))
    out = pl.pallas_call(
        _linear_kernel,
        out_shape=jax.ShapeDtypeStruct((Mp, N), jnp.float32),
        grid=(Mp // tm,),
        in_specs=[
            pl.BlockSpec((tm, K), lambda i: (i, 0)),
            pl.BlockSpec((K, N), lambda i: (0, 0)),
            pl.BlockSpec((1, N), lambda i: (0, 0)),
        ],
        out_specs=pl.BlockSpec((tm, N), lambda i: (i, 0)),
        compiler_params=pltpu.CompilerParams(
            dimension_semantics=("parallel",), vmem_limit_bytes=vmem),
    )(xp.astype(jnp.bfloat16), w.astype(jnp.bfloat16),
      b.reshape(1, N).astype(jnp.float32))
    return out[:M]


# ----------------------------------------------------------------------------
# Fused classification head: logits = (cls @ W_proj) @ W_cls + b_cls
# ----------------------------------------------------------------------------
def _head_kernel(x_ref, wp_ref, wc_ref, bc_ref, o_ref):
    feats = jnp.dot(x_ref[...], wp_ref[...], preferred_element_type=jnp.float32)
    o_ref[...] = (
        jnp.dot(feats.astype(wc_ref.dtype), wc_ref[...],
                preferred_element_type=jnp.float32) + bc_ref[...]
    )


def pallas_head(x, w_proj, w_cls, b_cls):
    """x: (B, D) -> logits (B, NC).  visual_projection (no bias) + classifier."""
    B, D = x.shape
    PD = w_proj.shape[1]
    NC = w_cls.shape[1]
    Bp = _round_up(max(B, 8), 8)
    xp = x if Bp == B else jnp.pad(x, ((0, Bp - B), (0, 0)))
    out = pl.pallas_call(
        _head_kernel,
        out_shape=jax.ShapeDtypeStruct((Bp, NC), jnp.float32),
        grid=(1,),
        in_specs=[
            pl.BlockSpec((Bp, D), lambda i: (0, 0)),
            pl.BlockSpec((D, PD), lambda i: (0, 0)),
            pl.BlockSpec((PD, NC), lambda i: (0, 0)),
            pl.BlockSpec((1, NC), lambda i: (0, 0)),
        ],
        out_specs=pl.BlockSpec((Bp, NC), lambda i: (0, 0)),
        compiler_params=pltpu.CompilerParams(vmem_limit_bytes=16 << 20),
    )(xp.astype(jnp.bfloat16), w_proj.astype(jnp.bfloat16),
      w_cls.astype(jnp.bfloat16), b_cls.reshape(1, NC).astype(jnp.float32))
    return out[:B]


# ----------------------------------------------------------------------------
# One CLIP encoder layer, computed on a (T, D) tile held in VMEM
# ----------------------------------------------------------------------------
# Row indices inside the packed (16, D) per-layer vector bundle.
_ROW_LN1_G, _ROW_LN1_B, _ROW_LN2_G, _ROW_LN2_B = 0, 1, 2, 3
_ROW_BQ, _ROW_BK, _ROW_BV, _ROW_BO, _ROW_BFC2 = 4, 5, 6, 7, 8
_VEC_D_ROWS = 16     # padded to a sublane multiple
_VEC_I_ROWS = 8

_ENC_KEYS = ("w_qkv", "w_o", "w_fc1", "w_fc2", "vec_d", "vec_i")


def _layer_norm(x, g, b, eps=1e-5):
    mu = jnp.mean(x, axis=-1, keepdims=True)
    var = jnp.mean(jnp.square(x - mu), axis=-1, keepdims=True)
    return (x - mu) * jax.lax.rsqrt(var + eps) * g + b


def _clip_layer(x, w_qkv, w_o, w_fc1, w_fc2, vec_d, vec_i, *, num_heads, valid_len):
    """HF CLIPEncoderLayer on a (T, D) f32 tile.

    Token rows >= valid_len are masked out as attention keys and zeroed in the
    output (valid_len may be a traced scalar)."""
    T, D = x.shape
    hd = D // num_heads

    def row(i):                       # (1, D) f32 parameter row
        return vec_d[i:i + 1, :]

    # ---- LayerNorm1 + self-attention (+ residual) ----
    h = _layer_norm(x, row(_ROW_LN1_G), row(_ROW_LN1_B))
    qkv = jnp.dot(h.astype(w_qkv.dtype), w_qkv,
                  preferred_element_type=jnp.float32)                  # (T, 3D) f32
    q = (qkv[:, 0:D] + row(_ROW_BQ)) * (float(hd) ** -0.5)
    k = qkv[:, D:2 * D] + row(_ROW_BK)
    v = qkv[:, 2 * D:3 * D] + row(_ROW_BV)

    def to_heads(t):                  # (T, D) -> (H, T, hd): heads-batched layout
        return jnp.stack(
            [t[:, i * hd:(i + 1) * hd] for i in range(num_heads)], axis=0)

    qh = to_heads(q).astype(jnp.bfloat16)
    kh = to_heads(k).astype(jnp.bfloat16)
    vh = to_heads(v).astype(jnp.bfloat16)

    # Heads-batched contractions instead of a per-head matmul loop.
    s = jnp.einsum("hqd,hkd->hqk", qh, kh,
                   preferred_element_type=jnp.float32)                 # (H, T, T)
    key_ok = jax.lax.broadcasted_iota(jnp.int32, s.shape, 2) < valid_len
    s = jnp.where(key_ok, s, -1e30)                                    # mask pad keys
    s = s - jnp.max(s, axis=-1, keepdims=True)
    p = jnp.exp(s)
    p = p * pl.reciprocal(jnp.sum(p, axis=-1, keepdims=True), approx=True)

    ctx = jnp.einsum("hqk,hkd->hqd", p.astype(jnp.bfloat16), vh,
                     preferred_element_type=jnp.float32)               # (H, T, hd)
    ctx = jnp.concatenate([ctx[i] for i in range(num_heads)], axis=-1)  # (T, D)

    attn = jnp.dot(ctx.astype(w_o.dtype), w_o,
                   preferred_element_type=jnp.float32) + row(_ROW_BO)
    x = x + attn

    # ---- LayerNorm2 + MLP: fc1 -> quick_gelu -> fc2 (+ residual) ----
    h2 = _layer_norm(x, row(_ROW_LN2_G), row(_ROW_LN2_B))
    f = jnp.dot(h2.astype(w_fc1.dtype), w_fc1,
                preferred_element_type=jnp.float32) + vec_i[0:1, :]
    f = f * jax.nn.sigmoid(1.702 * f)                                  # quick_gelu
    m = jnp.dot(f.astype(w_fc2.dtype), w_fc2,
                preferred_element_type=jnp.float32) + row(_ROW_BFC2)
    y = x + m

    # Keep padded rows exactly zero so nothing can grow/propagate across layers.
    row_ok = jax.lax.broadcasted_iota(jnp.int32, (T, 1), 0) < valid_len
    return jnp.where(row_ok, y, 0.0)


# ----------------------------------------------------------------------------
# Fused encoder + deep-VPT stack
#   grid = (batch, pass, layer); pass 0 = frozen CLIP encoder, pass 1 = VPT pass.
#   The (1, T, D) activation block stays resident in VMEM across (pass, layer).
# ----------------------------------------------------------------------------
def _clip_stack_kernel(x_ref, prompt_ref, wqkv_ref, wo_ref, wfc1_ref, wfc2_ref,
                       vecd_ref, veci_ref, o_ref, *, num_heads, num_tokens,
                       num_prompt):
    p = pl.program_id(1)
    l = pl.program_id(2)

    @pl.when((p == 0) & (l == 0))
    def _():
        o_ref[...] = x_ref[...]       # activation now lives in VMEM across (p, l)

    # Deep-VPT pass: fresh learned prompt for this layer is appended after the
    # real tokens (the layer is permutation-equivariant over tokens, so this is
    # equivalent to the reference's prepend + slice, with CLS kept at row 0).
    @pl.when(p == 1)
    def _():
        o_ref[:, num_tokens:num_tokens + num_prompt, :] = prompt_ref[...]

    valid_len = num_tokens + num_prompt * p
    y = _clip_layer(o_ref[0], wqkv_ref[0], wo_ref[0], wfc1_ref[0], wfc2_ref[0],
                    vecd_ref[0], veci_ref[0],
                    num_heads=num_heads, valid_len=valid_len)
    o_ref[0] = y


def _enc_vmem_budget(enc, act_bytes):
    L = enc["w_qkv"].shape[0]
    per_layer = sum(int(enc[k].size) * enc[k].dtype.itemsize for k in _ENC_KEYS) // L
    need = 2 * per_layer + 8 * act_bytes + (4 << 20)   # double-buffered weights + acts
    return int(min(max(need, 16 << 20), 64 << 20))


def clip_deep_vpt_stack(x, prompts, enc, *, num_heads, num_tokens):
    """x: (B, T, D) f32 embeddings (tokens in rows [0, num_tokens)).
    Runs all L frozen layers (pass 0) then the L-layer deep-VPT pass (pass 1)
    in a single fused pallas_call."""
    B, T, D = x.shape
    L, npt, _ = prompts.shape
    assert num_tokens + npt <= T
    weights = [enc[k] for k in _ENC_KEYS]
    kernel = functools.partial(_clip_stack_kernel, num_heads=num_heads,
                               num_tokens=num_tokens, num_prompt=npt)
    in_specs = [pl.BlockSpec((1, T, D), lambda b, p, l: (b, 0, 0)),
                pl.BlockSpec((1, npt, D), lambda b, p, l: (l, 0, 0))]
    in_specs += [pl.BlockSpec((1,) + tuple(w.shape[1:]), lambda b, p, l: (l, 0, 0))
                 for w in weights]
    return pl.pallas_call(
        kernel,
        out_shape=jax.ShapeDtypeStruct((B, T, D), jnp.float32),
        grid=(B, 2, L),
        in_specs=in_specs,
        out_specs=pl.BlockSpec((1, T, D), lambda b, p, l: (b, 0, 0)),
        compiler_params=pltpu.CompilerParams(
            dimension_semantics=("parallel", "arbitrary", "arbitrary"),
            vmem_limit_bytes=_enc_vmem_budget(enc, act_bytes=T * D * 4)),
    )(x, prompts.astype(jnp.float32), *weights)


# ----------------------------------------------------------------------------
# Glue (plain JAX): patch extraction, embedding assembly, final slicing
# ----------------------------------------------------------------------------
def extract_patches(images, patch):
    """NCHW images -> (B, num_patches, C*p*p), flattened as (c, ki, kj), matching
    Conv2d(stride=patch, bias=False) followed by flatten(2).transpose(1, 2)."""
    B, C, H, W = images.shape
    gh, gw = H // patch, W // patch
    x = images.reshape(B, C, gh, patch, gw, patch)
    x = x.transpose(0, 2, 4, 1, 3, 5)          # (B, gh, gw, C, p, p)
    return x.reshape(B, gh * gw, C * patch * patch)


def layer_norm_jax(x, g, b, eps=1e-5):
    mu = jnp.mean(x, axis=-1, keepdims=True)
    var = jnp.mean(jnp.square(x - mu), axis=-1, keepdims=True)
    return (x - mu) * jax.lax.rsqrt(var + eps) * g + b


def clip_with_deep_vpt_forward(images, params, cfg):
    B = images.shape[0]
    patch, D, heads, npt = cfg["patch"], cfg["hidden"], cfg["heads"], cfg["npt"]

    # --- frozen CLIP vision embeddings (conv-as-matmul, cls token, pos emb, pre-LN) ---
    patches = extract_patches(images, patch)                        # (B, P, C*p*p)
    P, K = patches.shape[1], patches.shape[2]
    patch_embeds = pallas_linear(
        patches.reshape(B * P, K), params["patch_w"], jnp.zeros((D,), jnp.float32)
    ).reshape(B, P, D)
    cls_tok = jnp.broadcast_to(params["class_embedding"][None, None, :], (B, 1, D))
    x = jnp.concatenate([cls_tok, patch_embeds], axis=1) + params["pos_emb"][None]
    x = layer_norm_jax(x, params["pre_ln_g"], params["pre_ln_b"])   # pre_layrnorm

    S = P + 1
    T = _round_up(S + npt, 8)               # one padded length for both fused passes
    x = jnp.pad(x, ((0, 0), (0, T - S), (0, 0)))   # zero pad tokens (masked in-kernel)

    # --- fused frozen encoder + deep-VPT pass (single pallas_call) ---
    vpt_out = clip_deep_vpt_stack(x, params["prompt_tokens"], params["enc"],
                                  num_heads=heads, num_tokens=S)

    cls_embedding = vpt_out[:, 0, :]                                # CLS stays at row 0
    # visual_projection (no bias) + classifier fused into one head kernel
    logits = pallas_head(cls_embedding, params["visual_proj_w"],
                         params["classifier_w"], params["classifier_b"])
    return logits


# ----------------------------------------------------------------------------
# Synthetic frozen-CLIP parameters, packed into the fused-kernel layout
# ----------------------------------------------------------------------------
def pack_encoder_layers(layers):
    """Per-layer dicts -> stacked/packed arrays consumed by the fused kernel."""
    L = len(layers)
    D = layers[0]["q_w"].shape[0]
    I = layers[0]["fc1_w"].shape[1]
    w_qkv = jnp.stack([jnp.concatenate([lp["q_w"], lp["k_w"], lp["v_w"]], axis=1)
                       for lp in layers]).astype(jnp.bfloat16)          # (L, D, 3D)
    w_o = jnp.stack([lp["o_w"] for lp in layers]).astype(jnp.bfloat16)  # (L, D, D)
    w_fc1 = jnp.stack([lp["fc1_w"] for lp in layers]).astype(jnp.bfloat16)
    w_fc2 = jnp.stack([lp["fc2_w"] for lp in layers]).astype(jnp.bfloat16)

    def vec_d_rows(lp):
        rows = [lp["ln1_g"], lp["ln1_b"], lp["ln2_g"], lp["ln2_b"],
                lp["q_b"], lp["k_b"], lp["v_b"], lp["o_b"], lp["fc2_b"]]
        rows = jnp.stack([r.reshape(D) for r in rows], axis=0)           # (9, D)
        return jnp.concatenate(
            [rows, jnp.zeros((_VEC_D_ROWS - rows.shape[0], D), jnp.float32)], axis=0)

    def vec_i_rows(lp):
        return jnp.concatenate(
            [lp["fc1_b"].reshape(1, I),
             jnp.zeros((_VEC_I_ROWS - 1, I), jnp.float32)], axis=0)

    vec_d = jnp.stack([vec_d_rows(lp) for lp in layers]).astype(jnp.float32)
    vec_i = jnp.stack([vec_i_rows(lp) for lp in layers]).astype(jnp.float32)
    return dict(w_qkv=w_qkv, w_o=w_o, w_fc1=w_fc1, w_fc2=w_fc2,
                vec_d=vec_d, vec_i=vec_i)


def init_params(key, cfg):
    D, I = cfg["hidden"], cfg["inter"]
    C, p = cfg["channels"], cfg["patch"]
    L, npt = cfg["layers"], cfg["npt"]
    PD, NC = cfg["proj_dim"], cfg["num_classes"]
    P = (cfg["image_size"] // p) ** 2

    keys = iter(jax.random.split(key, 128))

    def nrm(shape, scale=0.02):
        return (scale * jax.random.normal(next(keys), shape)).astype(jnp.float32)

    layers = []
    for _ in range(L):
        layers.append(dict(
            ln1_g=jnp.ones((D,), jnp.float32), ln1_b=jnp.zeros((D,), jnp.float32),
            q_w=nrm((D, D)), q_b=nrm((D,)),
            k_w=nrm((D, D)), k_b=nrm((D,)),
            v_w=nrm((D, D)), v_b=nrm((D,)),
            o_w=nrm((D, D)), o_b=nrm((D,)),
            ln2_g=jnp.ones((D,), jnp.float32), ln2_b=jnp.zeros((D,), jnp.float32),
            fc1_w=nrm((D, I)), fc1_b=nrm((I,)),
            fc2_w=nrm((I, D)), fc2_b=nrm((D,)),
        ))

    params = dict(
        patch_w=nrm((C * p * p, D)),
        class_embedding=nrm((D,)),
        pos_emb=nrm((P + 1, D)),
        pre_ln_g=jnp.ones((D,), jnp.float32),
        pre_ln_b=jnp.zeros((D,), jnp.float32),
        prompt_tokens=jax.random.normal(next(keys), (L, npt, D)).astype(jnp.float32),
        visual_proj_w=nrm((D, PD)),
        classifier_w=nrm((PD, NC)),
        classifier_b=jnp.zeros((NC,), jnp.float32),
        enc=pack_encoder_layers(layers),
    )
    return params


if __name__ == "__main__":
    cfg = dict(
        image_size=16,   # -> 2x2 = 4 patches, 5 tokens (padded to 8 in-kernel)
        patch=8,
        channels=3,
        hidden=128,      # lane-aligned hidden size
        heads=4,         # head_dim = 32
        inter=256,
        layers=2,
        npt=1,           # num_prompt_tokens
        proj_dim=64,     # CLIP projection_dim
        num_classes=4,
    )

    root = jax.random.PRNGKey(0)
    k_params, k_img = jax.random.split(root)
    params = init_params(k_params, cfg)

    images = jax.random.normal(
        k_img, (2, cfg["channels"], cfg["image_size"], cfg["image_size"]),
        jnp.float32)     # NCHW, like PyTorch

    fwd = jax.jit(lambda imgs, prm: clip_with_deep_vpt_forward(imgs, prm, cfg))
    logits = jax.block_until_ready(fwd(images, params))

    assert logits.shape == (2, cfg["num_classes"])
    assert bool(jnp.all(jnp.isfinite(logits)))
    print("KERNEL_OK")
</pallas_src>

<mosaic_0001>
module attributes {stable_mosaic.version = 11 : i64} {
  func.func @_linear_kernel(%arg0: i32, %arg1: memref<8x192xbf16, #tpu.memory_space<vmem>>, %arg2: memref<192x128xbf16, #tpu.memory_space<vmem>>, %arg3: memref<1x128xf32, #tpu.memory_space<vmem>>, %arg4: memref<8x128xf32, #tpu.memory_space<vmem>>) attributes {dimension_semantics = [#tpu.dimension_semantics<parallel>], iteration_bounds = array<i64: 1>, scalar_prefetch = 0 : i64, scratch_operands = 0 : i64, tpu.core_type = #tpu.core_type<tc>, window_params = [{transform_indices = @transform_0, window_bounds = array<i64: 8, 192>}, {pipeline_mode = #tpu.pipeline_mode<synchronous>, transform_indices = @transform_1, window_bounds = array<i64: 192, 128>}, {pipeline_mode = #tpu.pipeline_mode<synchronous>, transform_indices = @transform_2, window_bounds = array<i64: 1, 128>}, {transform_indices = @transform_3, window_bounds = array<i64: 8, 128>}]} {
    %c0 = arith.constant 0 : index
    %c0_0 = arith.constant 0 : index
    %0 = vector.load %arg1[%c0, %c0_0] : memref<8x192xbf16, #tpu.memory_space<vmem>>, vector<8x192xbf16>
    %c0_1 = arith.constant 0 : index
    %c0_2 = arith.constant 0 : index
    %1 = vector.load %arg2[%c0_1, %c0_2] : memref<192x128xbf16, #tpu.memory_space<vmem>>, vector<192x128xbf16>
    %cst = arith.constant dense<0.000000e+00> : vector<8x128xf32>
    %2 = tpu.matmul %0, %1, %cst {dimension_numbers = #tpu.dot_dimension_numbers<[1], [0], [0], [1], [0, 0, 1, 1], [], []>} : vector<8x192xbf16>, vector<192x128xbf16>, vector<8x128xf32> -> vector<8x128xf32>
    %c0_3 = arith.constant 0 : index
    %c0_4 = arith.constant 0 : index
    %3 = vector.load %arg3[%c0_3, %c0_4] : memref<1x128xf32, #tpu.memory_space<vmem>>, vector<1x128xf32>
    %4 = vector.broadcast %3 : vector<1x128xf32> to vector<8x128xf32>
    %5 = arith.addf %2, %4 : vector<8x128xf32>
    %c0_5 = arith.constant 0 : index
    %c0_6 = arith.constant 0 : index
    %6 = vector.load %arg4[%c0_5, %c0_6] : memref<8x128xf32, #tpu.memory_space<vmem>>, vector<8x128xf32>
    tpu.vector_store %arg4[%c0_5, %c0_6], %5 {strides = array<i32>} : memref<8x128xf32, #tpu.memory_space<vmem>>, vector<8x128xf32>,
    return
  }
  func.func @transform_0(%arg0: i32) -> (i32, i32) {
    %c0_i32 = arith.constant 0 : i32
    %c0_i32_0 = arith.constant 0 : i32
    return %arg0, %c0_i32 : i32, i32
  }
  func.func @transform_1(%arg0: i32) -> (i32, i32) {
    %c0_i32 = arith.constant 0 : i32
    %c0_i32_0 = arith.constant 0 : i32
    %c0_i32_1 = arith.constant 0 : i32
    return %c0_i32, %c0_i32_0 : i32, i32
  }
  func.func @transform_2(%arg0: i32) -> (i32, i32) {
    %c0_i32 = arith.constant 0 : i32
    %c0_i32_0 = arith.constant 0 : i32
    %c0_i32_1 = arith.constant 0 : i32
    return %c0_i32, %c0_i32_0 : i32, i32
  }
  func.func @transform_3(%arg0: i32) -> (i32, i32) {
    %c0_i32 = arith.constant 0 : i32
    %c0_i32_0 = arith.constant 0 : i32
    return %arg0, %c0_i32 : i32, i32
  }
}

module attributes {stable_mosaic.version = 11 : i64} {
  func.func @_clip_stack_kernel(%arg0: i32, %arg1: i32, %arg2: i32, %arg3: memref<1x8x128xf32, #tpu.memory_space<vmem>>, %arg4: memref<1x1x128xf32, #tpu.memory_space<vmem>>, %arg5: memref<1x128x384xbf16, #tpu.memory_space<vmem>>, %arg6: memref<1x128x128xbf16, #tpu.memory_space<vmem>>, %arg7: memref<1x128x256xbf16, #tpu.memory_space<vmem>>, %arg8: memref<1x256x128xbf16, #tpu.memory_space<vmem>>, %arg9: memref<1x16x128xf32, #tpu.memory_space<vmem>>, %arg10: memref<1x8x256xf32, #tpu.memory_space<vmem>>, %arg11: memref<1x8x128xf32, #tpu.memory_space<vmem>>) attributes {dimension_semantics = [#tpu.dimension_semantics<parallel>, #tpu.dimension_semantics<arbitrary>, #tpu.dimension_semantics<arbitrary>], iteration_bounds = array<i64: 2, 2, 2>, scalar_prefetch = 0 : i64, scratch_operands = 0 : i64, tpu.core_type = #tpu.core_type<tc>, window_params = [{transform_indices = @transform_0, window_bounds = array<i64: 1, 8, 128>}, {transform_indices = @transform_1, window_bounds = array<i64: 1, 1, 128>}, {transform_indices = @transform_2, window_bounds = array<i64: 1, 128, 384>}, {transform_indices = @transform_3, window_bounds = array<i64: 1, 128, 128>}, {transform_indices = @transform_4, window_bounds = array<i64: 1, 128, 256>}, {transform_indices = @transform_5, window_bounds = array<i64: 1, 256, 128>}, {transform_indices = @transform_6, window_bounds = array<i64: 1, 16, 128>}, {transform_indices = @transform_7, window_bounds = array<i64: 1, 8, 256>}, {transform_indices = @transform_8, window_bounds = array<i64: 1, 8, 128>}]} {
    %c0_i32 = arith.constant 0 : i32
    %0 = arith.cmpi eq, %arg1, %c0_i32 : i32
    %c0_i32_0 = arith.constant 0 : i32
    %1 = arith.cmpi eq, %arg2, %c0_i32_0 : i32
    %2 = arith.andi %0, %1 : i1
    %3 = arith.extui %2 : i1 to i32
    %c0_i32_1 = arith.constant 0 : i32
    %4 = arith.cmpi ne, %3, %c0_i32_1 : i32
    scf.if %4 {
      %c0_49 = arith.constant 0 : index
      %c0_50 = arith.constant 0 : index
      %c0_51 = arith.constant 0 : index
      %180 = vector.load %arg3[%c0_49, %c0_50, %c0_51] : memref<1x8x128xf32, #tpu.memory_space<vmem>>, vector<1x8x128xf32>
      %c0_52 = arith.constant 0 : index
      %c0_53 = arith.constant 0 : index
      %c0_54 = arith.constant 0 : index
      %181 = vector.load %arg11[%c0_52, %c0_53, %c0_54] : memref<1x8x128xf32, #tpu.memory_space<vmem>>, vector<1x8x128xf32>
      tpu.vector_store %arg11[%c0_52, %c0_53, %c0_54], %180 {strides = array<i32>} : memref<1x8x128xf32, #tpu.memory_space<vmem>>, vector<1x8x128xf32>,
    } else {
    }
    %c1_i32 = arith.constant 1 : i32
    %5 = arith.cmpi eq, %arg1, %c1_i32 : i32
    %6 = arith.extui %5 : i1 to i32
    %c0_i32_2 = arith.constant 0 : i32
    %7 = arith.cmpi ne, %6, %c0_i32_2 : i32
    scf.if %7 {
      %c0_49 = arith.constant 0 : index
      %c0_50 = arith.constant 0 : index
      %c0_51 = arith.constant 0 : index
      %180 = vector.load %arg4[%c0_49, %c0_50, %c0_51] : memref<1x1x128xf32, #tpu.memory_space<vmem>>, vector<1x1x128xf32>
      %c0_52 = arith.constant 0 : index
      %c5 = arith.constant 5 : index
      %c0_53 = arith.constant 0 : index
      %181 = vector.load %arg11[%c0_52, %c5, %c0_53] : memref<1x8x128xf32, #tpu.memory_space<vmem>>, vector<1x1x128xf32>
      tpu.vector_store %arg11[%c0_52, %c5, %c0_53], %180 {strides = array<i32>} : memref<1x8x128xf32, #tpu.memory_space<vmem>>, vector<1x1x128xf32>,
    } else {
    }
    %c1_i32_3 = arith.constant 1 : i32
    %8 = arith.muli %c1_i32_3, %arg1 : i32
    %c5_i32 = arith.constant 5 : i32
    %9 = arith.addi %c5_i32, %8 : i32
    %c0 = arith.constant 0 : index
    %c0_4 = arith.constant 0 : index
    %c0_5 = arith.constant 0 : index
    %10 = vector.load %arg11[%c0, %c0_4, %c0_5] : memref<1x8x128xf32, #tpu.memory_space<vmem>>, vector<1x8x128xf32>
    %11 = vector.shape_cast %10 : vector<1x8x128xf32> to vector<8x128xf32>
    %c0_6 = arith.constant 0 : index
    %c0_7 = arith.constant 0 : index
    %c0_8 = arith.constant 0 : index
    %12 = vector.load %arg5[%c0_6, %c0_7, %c0_8] : memref<1x128x384xbf16, #tpu.memory_space<vmem>>, vector<1x128x384xbf16>
    %13 = vector.shape_cast %12 : vector<1x128x384xbf16> to vector<128x384xbf16>
    %c0_9 = arith.constant 0 : index
    %c0_10 = arith.constant 0 : index
    %c0_11 = arith.constant 0 : index
    %14 = vector.load %arg6[%c0_9, %c0_10, %c0_11] : memref<1x128x128xbf16, #tpu.memory_space<vmem>>, vector<1x128x128xbf16>
    %15 = vector.shape_cast %14 : vector<1x128x128xbf16> to vector<128x128xbf16>
    %c0_12 = arith.constant 0 : index
    %c0_13 = arith.constant 0 : index
    %c0_14 = arith.constant 0 : index
    %16 = vector.load %arg7[%c0_12, %c0_13, %c0_14] : memref<1x128x256xbf16, #tpu.memory_space<vmem>>, vector<1x128x256xbf16>
    %17 = vector.shape_cast %16 : vector<1x128x256xbf16> to vector<128x256xbf16>
    %c0_15 = arith.constant 0 : index
    %c0_16 = arith.constant 0 : index
    %c0_17 = arith.constant 0 : index
    %18 = vector.load %arg8[%c0_15, %c0_16, %c0_17] : memref<1x256x128xbf16, #tpu.memory_space<vmem>>, vector<1x256x128xbf16>
    %19 = vector.shape_cast %18 : vector<1x256x128xbf16> to vector<256x128xbf16>
    %c0_18 = arith.constant 0 : index
    %c0_19 = arith.constant 0 : index
    %c0_20 = arith.constant 0 : index
    %20 = vector.load %arg9[%c0_18, %c0_19, %c0_20] : memref<1x16x128xf32, #tpu.memory_space<vmem>>, vector<1x16x128xf32>
    %21 = vector.shape_cast %20 : vector<1x16x128xf32> to vector<16x128xf32>
    %c0_21 = arith.constant 0 : index
    %c0_22 = arith.constant 0 : index
    %c0_23 = arith.constant 0 : index
    %22 = vector.load %arg10[%c0_21, %c0_22, %c0_23] : memref<1x8x256xf32, #tpu.memory_space<vmem>>, vector<1x8x256xf32>
    %23 = vector.shape_cast %22 : vector<1x8x256xf32> to vector<8x256xf32>
    %24 = vector.extract_strided_slice %21 {offsets = [0, 0], sizes = [1, 128], strides = [1, 1]} : vector<16x128xf32> to vector<1x128xf32>
    %25 = vector.extract_strided_slice %21 {offsets = [1, 0], sizes = [1, 128], strides = [1, 1]} : vector<16x128xf32> to vector<1x128xf32>
    %cst = arith.constant dense<0.000000e+00> : vector<8xf32>
    %26 = vector.multi_reduction <add>, %11, %cst [1] : vector<8x128xf32> to vector<8xf32>
    %27 = vector.shape_cast %26 : vector<8xf32> to vector<8x1xf32>
    %cst_24 = arith.constant 1.280000e+02 : f32
    %28 = vector.broadcast %cst_24 : f32 to vector<8x1xf32>
    %29 = arith.divf %27, %28 : vector<8x1xf32>
    %30 = vector.broadcast %29 : vector<8x1xf32> to vector<8x128xf32>
    %31 = arith.subf %11, %30 : vector<8x128xf32>
    %32 = arith.mulf %31, %31 : vector<8x128xf32>
    %cst_25 = arith.constant dense<0.000000e+00> : vector<8xf32>
    %33 = vector.multi_reduction <add>, %32, %cst_25 [1] : vector<8x128xf32> to vector<8xf32>
    %34 = vector.shape_cast %33 : vector<8xf32> to vector<8x1xf32>
    %cst_26 = arith.constant 1.280000e+02 : f32
    %35 = vector.broadcast %cst_26 : f32 to vector<8x1xf32>
    %36 = arith.divf %34, %35 : vector<8x1xf32>
    %37 = vector.broadcast %29 : vector<8x1xf32> to vector<8x128xf32>
    %38 = arith.subf %11, %37 : vector<8x128xf32>
    %cst_27 = arith.constant 9.99999974E-6 : f32
    %39 = vector.broadcast %cst_27 : f32 to vector<8x1xf32>
    %40 = arith.addf %36, %39 : vector<8x1xf32>
    %41 = math.rsqrt %40 : vector<8x1xf32>
    %42 = vector.broadcast %41 : vector<8x1xf32> to vector<8x128xf32>
    %43 = arith.mulf %38, %42 : vector<8x128xf32>
    %44 = vector.broadcast %24 : vector<1x128xf32> to vector<8x128xf32>
    %45 = arith.mulf %43, %44 : vector<8x128xf32>
    %46 = vector.broadcast %25 : vector<1x128xf32> to vector<8x128xf32>
    %47 = arith.addf %45, %46 : vector<8x128xf32>
    %48 = arith.truncf %47 : vector<8x128xf32> to vector<8x128xbf16>
    %cst_28 = arith.constant dense<0.000000e+00> : vector<8x384xf32>
    %49 = tpu.matmul %48, %13, %cst_28 {dimension_numbers = #tpu.dot_dimension_numbers<[1], [0], [0], [1], [0, 0, 1, 1], [], []>} : vector<8x128xbf16>, vector<128x384xbf16>, vector<8x384xf32> -> vector<8x384xf32>
    %50 = vector.extract_strided_slice %49 {offsets = [0, 0], sizes = [8, 128], strides = [1, 1]} : vector<8x384xf32> to vector<8x128xf32>
    %51 = vector.extract_strided_slice %21 {offsets = [4, 0], sizes = [1, 128], strides = [1, 1]} : vector<16x128xf32> to vector<1x128xf32>
    %52 = vector.broadcast %51 : vector<1x128xf32> to vector<8x128xf32>
    %53 = arith.addf %50, %52 : vector<8x128xf32>
    %cst_29 = arith.constant 0.176776692 : f32
    %54 = vector.broadcast %cst_29 : f32 to vector<8x128xf32>
    %55 = arith.mulf %53, %54 : vector<8x128xf32>
    %56 = vector.extract_strided_slice %49 {offsets = [0, 128], sizes = [8, 128], strides = [1, 1]} : vector<8x384xf32> to vector<8x128xf32>
    %57 = vector.extract_strided_slice %21 {offsets = [5, 0], sizes = [1, 128], strides = [1, 1]} : vector<16x128xf32> to vector<1x128xf32>
    %58 = vector.broadcast %57 : vector<1x128xf32> to vector<8x128xf32>
    %59 = arith.addf %56, %58 : vector<8x128xf32>
    %60 = vector.extract_strided_slice %49 {offsets = [0, 256], sizes = [8, 128], strides = [1, 1]} : vector<8x384xf32> to vector<8x128xf32>
    %61 = vector.extract_strided_slice %21 {offsets = [6, 0], sizes = [1, 128], strides = [1, 1]} : vector<16x128xf32> to vector<1x128xf32>
    %62 = vector.broadcast %61 : vector<1x128xf32> to vector<8x128xf32>
    %63 = arith.addf %60, %62 : vector<8x128xf32>
    %64 = vector.extract_strided_slice %55 {offsets = [0, 0], sizes = [8, 32], strides = [1, 1]} : vector<8x128xf32> to vector<8x32xf32>
    %65 = vector.extract_strided_slice %55 {offsets = [0, 32], sizes = [8, 32], strides = [1, 1]} : vector<8x128xf32> to vector<8x32xf32>
    %66 = vector.extract_strided_slice %55 {offsets = [0, 64], sizes = [8, 32], strides = [1, 1]} : vector<8x128xf32> to vector<8x32xf32>
    %67 = vector.extract_strided_slice %55 {offsets = [0, 96], sizes = [8, 32], strides = [1, 1]} : vector<8x128xf32> to vector<8x32xf32>
    %68 = vector.shape_cast %64 : vector<8x32xf32> to vector<1x8x32xf32>
    %69 = vector.shape_cast %65 : vector<8x32xf32> to vector<1x8x32xf32>
    %70 = vector.shape_cast %66 : vector<8x32xf32> to vector<1x8x32xf32>
    %71 = vector.shape_cast %67 : vector<8x32xf32> to vector<1x8x32xf32>
    %72 = tpu.concatenate %68, %69, %70, %71 in 0 : vector<1x8x32xf32>, vector<1x8x32xf32>, vector<1x8x32xf32>, vector<1x8x32xf32> -> vector<4x8x32xf32>
    %73 = arith.truncf %72 : vector<4x8x32xf32> to vector<4x8x32xbf16>
    %74 = vector.extract_strided_slice %59 {offsets = [0, 0], sizes = [8, 32], strides = [1, 1]} : vector<8x128xf32> to vector<8x32xf32>
    %75 = vector.extract_strided_slice %59 {offsets = [0, 32], sizes = [8, 32], strides = [1, 1]} : vector<8x128xf32> to vector<8x32xf32>
    %76 = vector.extract_strided_slice %59 {offsets = [0, 64], sizes = [8, 32], strides = [1, 1]} : vector<8x128xf32> to vector<8x32xf32>
    %77 = vector.extract_strided_slice %59 {offsets = [0, 96], sizes = [8, 32], strides = [1, 1]} : vector<8x128xf32> to vector<8x32xf32>
    %78 = vector.shape_cast %74 : vector<8x32xf32> to vector<1x8x32xf32>
    %79 = vector.shape_cast %75 : vector<8x32xf32> to vector<1x8x32xf32>
    %80 = vector.shape_cast %76 : vector<8x32xf32> to vector<1x8x32xf32>
    %81 = vector.shape_cast %77 : vector<8x32xf32> to vector<1x8x32xf32>
    %82 = tpu.concatenate %78, %79, %80, %81 in 0 : vector<1x8x32xf32>, vector<1x8x32xf32>, vector<1x8x32xf32>, vector<1x8x32xf32> -> vector<4x8x32xf32>
    %83 = arith.truncf %82 : vector<4x8x32xf32> to vector<4x8x32xbf16>
    %84 = vector.extract_strided_slice %63 {offsets = [0, 0], sizes = [8, 32], strides = [1, 1]} : vector<8x128xf32> to vector<8x32xf32>
    %85 = vector.extract_strided_slice %63 {offsets = [0, 32], sizes = [8, 32], strides = [1, 1]} : vector<8x128xf32> to vector<8x32xf32>
    %86 = vector.extract_strided_slice %63 {offsets = [0, 64], sizes = [8, 32], strides = [1, 1]} : vector<8x128xf32> to vector<8x32xf32>
    %87 = vector.extract_strided_slice %63 {offsets = [0, 96], sizes = [8, 32], strides = [1, 1]} : vector<8x128xf32> to vector<8x32xf32>
    %88 = vector.shape_cast %84 : vector<8x32xf32> to vector<1x8x32xf32>
    %89 = vector.shape_cast %85 : vector<8x32xf32> to vector<1x8x32xf32>
    %90 = vector.shape_cast %86 : vector<8x32xf32> to vector<1x8x32xf32>
    %91 = vector.shape_cast %87 : vector<8x32xf32> to vector<1x8x32xf32>
    %92 = tpu.concatenate %88, %89, %90, %91 in 0 : vector<1x8x32xf32>, vector<1x8x32xf32>, vector<1x8x32xf32>, vector<1x8x32xf32> -> vector<4x8x32xf32>
    %93 = arith.truncf %92 : vector<4x8x32xf32> to vector<4x8x32xbf16>
    "tpu.trace_start"() <{level = 10 : i32, message = "hqd,hkd->hqk"}> : () -> ()
    %cst_30 = arith.constant dense<0.000000e+00> : vector<4x8x8xf32>
    %94 = tpu.matmul %73, %83, %cst_30 {dimension_numbers = #tpu.dot_dimension_numbers<[2], [2], [1], [1], [0, 0, 0, 1, 1, 1], [0], [0]>} : vector<4x8x32xbf16>, vector<4x8x32xbf16>, vector<4x8x8xf32> -> vector<4x8x8xf32>
    "tpu.trace_stop"() : () -> ()
    %95 = tpu.iota {dimensions = array<i32: 2>} : vector<4x8x8xi32>
    %96 = vector.broadcast %9 : i32 to vector<4x8x8xi32>
    %97 = arith.cmpi slt, %95, %96 : vector<4x8x8xi32>
    %cst_31 = arith.constant -1.000000e+30 : f32
    %98 = vector.broadcast %cst_31 : f32 to vector<4x8x8xf32>
    %99 = arith.select %97, %94, %98 : vector<4x8x8xi1>, vector<4x8x8xf32>
    %cst_32 = arith.constant dense<0xFF800000> : vector<4x8xf32>
    %100 = vector.multi_reduction <maximumf>, %99, %cst_32 [2] : vector<4x8x8xf32> to vector<4x8xf32>
    %101 = vector.shape_cast %100 : vector<4x8xf32> to vector<4x8x1xf32>
    %102 = vector.broadcast %101 : vector<4x8x1xf32> to vector<4x8x8xf32>
    %103 = arith.subf %99, %102 : vector<4x8x8xf32>
    %104 = math.exp %103 : vector<4x8x8xf32>
    %cst_33 = arith.constant dense<0.000000e+00> : vector<4x8xf32>
    %105 = vector.multi_reduction <add>, %104, %cst_33 [2] : vector<4x8x8xf32> to vector<4x8xf32>
    %106 = vector.shape_cast %105 : vector<4x8xf32> to vector<4x8x1xf32>
    %107 = tpu.reciprocal %106 {approx = true} : vector<4x8x1xf32> -> vector<4x8x1xf32>
    %108 = vector.broadcast %107 : vector<4x8x1xf32> to vector<4x8x8xf32>
    %109 = arith.mulf %104, %108 : vector<4x8x8xf32>
    %110 = arith.truncf %109 : vector<4x8x8xf32> to vector<4x8x8xbf16>
    "tpu.trace_start"() <{level = 10 : i32, message = "hqk,hkd->hqd"}> : () -> ()
    %cst_34 = arith.constant dense<0.000000e+00> : vector<4x8x32xf32>
    %111 = tpu.matmul %110, %93, %cst_34 {dimension_numbers = #tpu.dot_dimension_numbers<[2], [1], [1], [2], [0, 0, 0, 1, 1, 2], [0], [0]>} : vector<4x8x8xbf16>, vector<4x8x32xbf16>, vector<4x8x32xf32> -> vector<4x8x32xf32>
    "tpu.trace_stop"() : () -> ()
    %112 = vector.extract_strided_slice %111 {offsets = [0, 0, 0], sizes = [1, 8, 32], strides = [1, 1, 1]} : vector<4x8x32xf32> to vector<1x8x32xf32>
    %113 = vector.shape_cast %112 : vector<1x8x32xf32> to vector<8x32xf32>
    %114 = vector.extract_strided_slice %111 {offsets = [1, 0, 0], sizes = [1, 8, 32], strides = [1, 1, 1]} : vector<4x8x32xf32> to vector<1x8x32xf32>
    %115 = vector.shape_cast %114 : vector<1x8x32xf32> to vector<8x32xf32>
    %116 = vector.extract_strided_slice %111 {offsets = [2, 0, 0], sizes = [1, 8, 32], strides = [1, 1, 1]} : vector<4x8x32xf32> to vector<1x8x32xf32>
    %117 = vector.shape_cast %116 : vector<1x8x32xf32> to vector<8x32xf32>
    %118 = vector.extract_strided_slice %111 {offsets = [3, 0, 0], sizes = [1, 8, 32], strides = [1, 1, 1]} : vector<4x8x32xf32> to vector<1x8x32xf32>
    %119 = vector.shape_cast %118 : vector<1x8x32xf32> to vector<8x32xf32>
    %120 = tpu.concatenate %113, %115, %117, %119 in 1 : vector<8x32xf32>, vector<8x32xf32>, vector<8x32xf32>, vector<8x32xf32> -> vector<8x128xf32>
    %121 = arith.truncf %120 : vector<8x128xf32> to vector<8x128xbf16>
    %cst_35 = arith.constant dense<0.000000e+00> : vector<8x128xf32>
    %122 = tpu.matmul %121, %15, %cst_35 {dimension_numbers = #tpu.dot_dimension_numbers<[1], [0], [0], [1], [0, 0, 1, 1], [], []>} : vector<8x128xbf16>, vector<128x128xbf16>, vector<8x128xf32> -> vector<8x128xf32>
    %123 = vector.extract_strided_slice %21 {offsets = [7, 0], sizes = [1, 128], strides = [1, 1]} : vector<16x128xf32> to vector<1x128xf32>
    %124 = vector.broadcast %123 : vector<1x128xf32> to vector<8x128xf32>
    %125 = arith.addf %122, %124 : vector<8x128xf32>
    %126 = arith.addf %11, %125 : vector<8x128xf32>
    %127 = vector.extract_strided_slice %21 {offsets = [2, 0], sizes = [1, 128], strides = [1, 1]} : vector<16x128xf32> to vector<1x128xf32>
    %128 = vector.extract_strided_slice %21 {offsets = [3, 0], sizes = [1, 128], strides = [1, 1]} : vector<16x128xf32> to vector<1x128xf32>
    %cst_36 = arith.constant dense<0.000000e+00> : vector<8xf32>
    %129 = vector.multi_reduction <add>, %126, %cst_36 [1] : vector<8x128xf32> to vector<8xf32>
    %130 = vector.shape_cast %129 : vector<8xf32> to vector<8x1xf32>
    %cst_37 = arith.constant 1.280000e+02 : f32
    %131 = vector.broadcast %cst_37 : f32 to vector<8x1xf32>
    %132 = arith.divf %130, %131 : vector<8x1xf32>
    %133 = vector.broadcast %132 : vector<8x1xf32> to vector<8x128xf32>
    %134 = arith.subf %126, %133 : vector<8x128xf32>
    %135 = arith.mulf %134, %134 : vector<8x128xf32>
    %cst_38 = arith.constant dense<0.000000e+00> : vector<8xf32>
    %136 = vector.multi_reduction <add>, %135, %cst_38 [1] : vector<8x128xf32> to vector<8xf32>
    %137 = vector.shape_cast %136 : vector<8xf32> to vector<8x1xf32>
    %cst_39 = arith.constant 1.280000e+02 : f32
    %138 = vector.broadcast %cst_39 : f32 to vector<8x1xf32>
    %139 = arith.divf %137, %138 : vector<8x1xf32>
    %140 = vector.broadcast %132 : vector<8x1xf32> to vector<8x128xf32>
    %141 = arith.subf %126, %140 : vector<8x128xf32>
    %cst_40 = arith.constant 9.99999974E-6 : f32
    %142 = vector.broadcast %cst_40 : f32 to vector<8x1xf32>
    %143 = arith.addf %139, %142 : vector<8x1xf32>
    %144 = math.rsqrt %143 : vector<8x1xf32>
    %145 = vector.broadcast %144 : vector<8x1xf32> to vector<8x128xf32>
    %146 = arith.mulf %141, %145 : vector<8x128xf32>
    %147 = vector.broadcast %127 : vector<1x128xf32> to vector<8x128xf32>
    %148 = arith.mulf %146, %147 : vector<8x128xf32>
    %149 = vector.broadcast %128 : vector<1x128xf32> to vector<8x128xf32>
    %150 = arith.addf %148, %149 : vector<8x128xf32>
    %151 = arith.truncf %150 : vector<8x128xf32> to vector<8x128xbf16>
    %cst_41 = arith.constant dense<0.000000e+00> : vector<8x256xf32>
    %152 = tpu.matmul %151, %17, %cst_41 {dimension_numbers = #tpu.dot_dimension_numbers<[1], [0], [0], [1], [0, 0, 1, 1], [], []>} : vector<8x128xbf16>, vector<128x256xbf16>, vector<8x256xf32> -> vector<8x256xf32>
    %153 = vector.extract_strided_slice %23 {offsets = [0, 0], sizes = [1, 256], strides = [1, 1]} : vector<8x256xf32> to vector<1x256xf32>
    %154 = vector.broadcast %153 : vector<1x256xf32> to vector<8x256xf32>
    %155 = arith.addf %152, %154 : vector<8x256xf32>
    %cst_42 = arith.constant 1.702000e+00 : f32
    %156 = vector.broadcast %cst_42 : f32 to vector<8x256xf32>
    %157 = arith.mulf %156, %155 : vector<8x256xf32>
    %158 = arith.negf %157 : vector<8x256xf32>
    %159 = math.exp %158 : vector<8x256xf32>
    %cst_43 = arith.constant 1.000000e+00 : f32
    %160 = vector.broadcast %cst_43 : f32 to vector<8x256xf32>
    %161 = arith.addf %160, %159 : vector<8x256xf32>
    %162 = arith.divf %160, %161 : vector<8x256xf32>
    %163 = arith.mulf %155, %162 : vector<8x256xf32>
    %164 = arith.truncf %163 : vector<8x256xf32> to vector<8x256xbf16>
    %cst_44 = arith.constant dense<0.000000e+00> : vector<8x128xf32>
    %165 = tpu.matmul %164, %19, %cst_44 {dimension_numbers = #tpu.dot_dimension_numbers<[1], [0], [0], [1], [0, 0, 1, 1], [], []>} : vector<8x256xbf16>, vector<256x128xbf16>, vector<8x128xf32> -> vector<8x128xf32>
    %166 = vector.extract_strided_slice %21 {offsets = [8, 0], sizes = [1, 128], strides = [1, 1]} : vector<16x128xf32> to vector<1x128xf32>
    %167 = vector.broadcast %166 : vector<1x128xf32> to vector<8x128xf32>
    %168 = arith.addf %165, %167 : vector<8x128xf32>
    %169 = arith.addf %126, %168 : vector<8x128xf32>
    %170 = tpu.iota {dimensions = array<i32: 0>} : vector<8x1xi32>
    %171 = vector.broadcast %9 : i32 to vector<8x1xi32>
    %172 = arith.cmpi slt, %170, %171 : vector<8x1xi32>
    %cst_45 = arith.constant 0.000000e+00 : f32
    %173 = vector.shape_cast %172 : vector<8x1xi1> to vector<8x1xi1>
    %174 = vector.broadcast %173 : vector<8x1xi1> to vector<8x128xi1>
    %175 = vector.broadcast %cst_45 : f32 to vector<8x128xf32>
    %176 = arith.select %174, %169, %175 : vector<8x128xi1>, vector<8x128xf32>
    %c0_46 = arith.constant 0 : index
    %c0_47 = arith.constant 0 : index
    %c0_48 = arith.constant 0 : index
    %177 = vector.load %arg11[%c0_46, %c0_47, %c0_48] : memref<1x8x128xf32, #tpu.memory_space<vmem>>, vector<1x8x128xf32>
    %178 = vector.shape_cast %177 : vector<1x8x128xf32> to vector<8x128xf32>
    %179 = vector.shape_cast %176 : vector<8x128xf32> to vector<1x8x128xf32>
    tpu.vector_store %arg11[%c0_46, %c0_47, %c0_48], %179 {strides = array<i32>} : memref<1x8x128xf32, #tpu.memory_space<vmem>>, vector<1x8x128xf32>,
    return
  }
  func.func @transform_0(%arg0: i32, %arg1: i32, %arg2: i32) -> (i32, i32, i32) {
    %c0_i32 = arith.constant 0 : i32
    %c0_i32_0 = arith.constant 0 : i32
    %c0_i32_1 = arith.constant 0 : i32
    return %arg0, %c0_i32, %c0_i32_0 : i32, i32, i32
  }
  func.func @transform_1(%arg0: i32, %arg1: i32, %arg2: i32) -> (i32, i32, i32) {
    %c0_i32 = arith.constant 0 : i32
    %c0_i32_0 = arith.constant 0 : i32
    %c0_i32_1 = arith.constant 0 : i32
    return %arg2, %c0_i32, %c0_i32_0 : i32, i32, i32
  }
  func.func @transform_2(%arg0: i32, %arg1: i32, %arg2: i32) -> (i32, i32, i32) {
    %c0_i32 = arith.constant 0 : i32
    %c0_i32_0 = arith.constant 0 : i32
    %c0_i32_1 = arith.constant 0 : i32
    return %arg2, %c0_i32, %c0_i32_0 : i32, i32, i32
  }
  func.func @transform_3(%arg0: i32, %arg1: i32, %arg2: i32) -> (i32, i32, i32) {
    %c0_i32 = arith.constant 0 : i32
    %c0_i32_0 = arith.constant 0 : i32
    %c0_i32_1 = arith.constant 0 : i32
    return %arg2, %c0_i32, %c0_i32_0 : i32, i32, i32
  }
  func.func @transform_4(%arg0: i32, %arg1: i32, %arg2: i32) -> (i32, i32, i32) {
    %c0_i32 = arith.constant 0 : i32
    %c0_i32_0 = arith.constant 0 : i32
    %c0_i32_1 = arith.constant 0 : i32
    return %arg2, %c0_i32, %c0_i32_0 : i32, i32, i32
  }
  func.func @transform_5(%arg0: i32, %arg1: i32, %arg2: i32) -> (i32, i32, i32) {
    %c0_i32 = arith.constant 0 : i32
    %c0_i32_0 = arith.constant 0 : i32
    %c0_i32_1 = arith.constant 0 : i32
    return %arg2, %c0_i32, %c0_i32_0 : i32, i32, i32
  }
  func.func @transform_6(%arg0: i32, %arg1: i32, %arg2: i32) -> (i32, i32, i32) {
    %c0_i32 = arith.constant 0 : i32
    %c0_i32_0 = arith.constant 0 : i32
    %c0_i32_1 = arith.constant 0 : i32
    return %arg2, %c0_i32, %c0_i32_0 : i32, i32, i32
  }
  func.func @transform_7(%arg0: i32, %arg1: i32, %arg2: i32) -> (i32, i32, i32) {
    %c0_i32 = arith.constant 0 : i32
    %c0_i32_0 = arith.constant 0 : i32
    %c0_i32_1 = arith.constant 0 : i32
    return %arg2, %c0_i32, %c0_i32_0 : i32, i32, i32
  }
  func.func @transform_8(%arg0: i32, %arg1: i32, %arg2: i32) -> (i32, i32, i32) {
    %c0_i32 = arith.constant 0 : i32
    %c0_i32_0 = arith.constant 0 : i32
    %c0_i32_1 = arith.constant 0 : i32
    return %arg0, %c0_i32, %c0_i32_0 : i32, i32, i32
  }
}

module attributes {stable_mosaic.version = 11 : i64} {
  func.func @_head_kernel(%arg0: i32, %arg1: memref<8x128xbf16, #tpu.memory_space<vmem>>, %arg2: memref<128x64xbf16, #tpu.memory_space<vmem>>, %arg3: memref<64x4xbf16, #tpu.memory_space<vmem>>, %arg4: memref<1x4xf32, #tpu.memory_space<vmem>>, %arg5: memref<8x4xf32, #tpu.memory_space<vmem>>) attributes {dimension_semantics = [#tpu.dimension_semantics<arbitrary>], iteration_bounds = array<i64: 1>, scalar_prefetch = 0 : i64, scratch_operands = 0 : i64, tpu.core_type = #tpu.core_type<tc>, window_params = [{pipeline_mode = #tpu.pipeline_mode<synchronous>, transform_indices = @transform_0, window_bounds = array<i64: 8, 128>}, {pipeline_mode = #tpu.pipeline_mode<synchronous>, transform_indices = @transform_1, window_bounds = array<i64: 128, 64>}, {pipeline_mode = #tpu.pipeline_mode<synchronous>, transform_indices = @transform_2, window_bounds = array<i64: 64, 4>}, {pipeline_mode = #tpu.pipeline_mode<synchronous>, transform_indices = @transform_3, window_bounds = array<i64: 1, 4>}, {pipeline_mode = #tpu.pipeline_mode<synchronous>, transform_indices = @transform_4, window_bounds = array<i64: 8, 4>}]} {
    %c0 = arith.constant 0 : index
    %c0_0 = arith.constant 0 : index
    %0 = vector.load %arg1[%c0, %c0_0] : memref<8x128xbf16, #tpu.memory_space<vmem>>, vector<8x128xbf16>
    %c0_1 = arith.constant 0 : index
    %c0_2 = arith.constant 0 : index
    %1 = vector.load %arg2[%c0_1, %c0_2] : memref<128x64xbf16, #tpu.memory_space<vmem>>, vector<128x64xbf16>
    %cst = arith.constant dense<0.000000e+00> : vector<8x64xf32>
    %2 = tpu.matmul %0, %1, %cst {dimension_numbers = #tpu.dot_dimension_numbers<[1], [0], [0], [1], [0, 0, 1, 1], [], []>} : vector<8x128xbf16>, vector<128x64xbf16>, vector<8x64xf32> -> vector<8x64xf32>
    %3 = arith.truncf %2 : vector<8x64xf32> to vector<8x64xbf16>
    %c0_3 = arith.constant 0 : index
    %c0_4 = arith.constant 0 : index
    %4 = vector.load %arg3[%c0_3, %c0_4] : memref<64x4xbf16, #tpu.memory_space<vmem>>, vector<64x4xbf16>
    %cst_5 = arith.constant dense<0.000000e+00> : vector<8x4xf32>
    %5 = tpu.matmul %3, %4, %cst_5 {dimension_numbers = #tpu.dot_dimension_numbers<[1], [0], [0], [1], [0, 0, 1, 1], [], []>} : vector<8x64xbf16>, vector<64x4xbf16>, vector<8x4xf32> -> vector<8x4xf32>
    %c0_6 = arith.constant 0 : index
    %c0_7 = arith.constant 0 : index
    %6 = vector.load %arg4[%c0_6, %c0_7] : memref<1x4xf32, #tpu.memory_space<vmem>>, vector<1x4xf32>
    %7 = vector.broadcast %6 : vector<1x4xf32> to vector<8x4xf32>
    %8 = arith.addf %5, %7 : vector<8x4xf32>
    %c0_8 = arith.constant 0 : index
    %c0_9 = arith.constant 0 : index
    %9 = vector.load %arg5[%c0_8, %c0_9] : memref<8x4xf32, #tpu.memory_space<vmem>>, vector<8x4xf32>
    tpu.vector_store %arg5[%c0_8, %c0_9], %8 {strides = array<i32>} : memref<8x4xf32, #tpu.memory_space<vmem>>, vector<8x4xf32>,
    return
  }
  func.func @transform_0(%arg0: i32) -> (i32, i32) {
    %c0_i32 = arith.constant 0 : i32
    %c0_i32_0 = arith.constant 0 : i32
    %c0_i32_1 = arith.constant 0 : i32
    return %c0_i32, %c0_i32_0 : i32, i32
  }
  func.func @transform_1(%arg0: i32) -> (i32, i32) {
    %c0_i32 = arith.constant 0 : i32
    %c0_i32_0 = arith.constant 0 : i32
    %c0_i32_1 = arith.constant 0 : i32
    return %c0_i32, %c0_i32_0 : i32, i32
  }
  func.func @transform_2(%arg0: i32) -> (i32, i32) {
    %c0_i32 = arith.constant 0 : i32
    %c0_i32_0 = arith.constant 0 : i32
    %c0_i32_1 = arith.constant 0 : i32
    return %c0_i32, %c0_i32_0 : i32, i32
  }
  func.func @transform_3(%arg0: i32) -> (i32, i32) {
    %c0_i32 = arith.constant 0 : i32
    %c0_i32_0 = arith.constant 0 : i32
    %c0_i32_1 = arith.constant 0 : i32
    return %c0_i32, %c0_i32_0 : i32, i32
  }
  func.func @transform_4(%arg0: i32) -> (i32, i32) {
    %c0_i32 = arith.constant 0 : i32
    %c0_i32_0 = arith.constant 0 : i32
    %c0_i32_1 = arith.constant 0 : i32
    return %c0_i32, %c0_i32_0 : i32, i32
  }
}

</mosaic_0001>

<llo_original>
// kernel: _lambda_.3
$region0: #{_lambda_.3}
  #allocation0 [shape = 'u32[]', space=smem, size = 0x4, offset = 0x4, fixed_abs, tag = 'smem constant byte address 0x4 - core index']
  #allocation1 [shape = 'u32[72,128]{1,0:T(1,128)}', space=vmem, size = 0x9000, scoped, tag = 'internal scratch']
  %s0 = inlined_call_operand.vmem [shape: bf16[8,192], index: 0, kind: input, shape index: {}]
  %s1 = inlined_call_operand.vmem [shape: bf16[192,128], index: 1, kind: input, shape index: {}]
  %s2 = inlined_call_operand.vmem [shape: f32[1,128], index: 2, kind: input, shape index: {}]
  %s3 = inlined_call_operand.vmem [shape: f32[8,128], index: 3, kind: output, shape index: {}]
  %s4 = sld [smem:[#allocation0]]
  $region22: #{_lambda_.3} parent=0
    _
  %s6 = ssub.s32 1, %s4
  %s7 = scalar_select 0, %s6, %s4
  // Predicated region
  $region2: #{_lambda_.3} parent=0 // pred_check
    _
  $region3: #{_lambda_.3} parent=0 // pred_check_branch
    %9 = sbr.rel (0) target = $region5
  $region4: #{_lambda_.3} parent=0 // pred_region
    _
  $region5: #{_lambda_.3} parent=0 // pred_fallthru
    _
  // Predicated region
  $region6: #{_lambda_.3} parent=0 // pred_check
    _
  $region7: #{_lambda_.3} parent=0 // pred_check_branch
    %11 = sbr.rel (0) target = $region9
  $region8: #{_lambda_.3} parent=0 // pred_region
    _
  $region9: #{_lambda_.3} parent=0 // pred_fallthru
    _
  // Predicated region
  $region10: #{_lambda_.3} parent=0 // pred_check
    _
  $region11: #{_lambda_.3} parent=0 // pred_check_branch
    %13 = sbr.rel (0) target = $region13
  $region12: #{_lambda_.3} parent=0 // pred_region
    _
  $region13: #{_lambda_.3} parent=0 // pred_fallthru
    _
  %v15 = vld [vmem:[%s0] sm:$0xff]
  %v16 = vld [vmem:[%s1] sm:$0xf]
  %v17 = vld [vmem:[%s1 + $0x4] sm:$0xf]
  %v18 = vld [vmem:[%s1 + $0x8] sm:$0xf]
  %v19 = vld [vmem:[%s1 + $0xc] sm:$0xf]
  %v20 = vld [vmem:[%s1 + $0x10] sm:$0xf]
  %v21 = vld [vmem:[%s1 + $0x14] sm:$0xf]
  %v22 = vld [vmem:[%s1 + $0x18] sm:$0xf]
  %v23 = vld [vmem:[%s1 + $0x1c] sm:$0xf]
  %v24 = vld [vmem:[%s1 + $0x20] sm:$0xf]
  %v25 = vld [vmem:[%s1 + $0x24] sm:$0xf]
  %v26 = vld [vmem:[%s1 + $0x28] sm:$0xf]
  %v27 = vld [vmem:[%s1 + $0x2c] sm:$0xf]
  %v28 = vld [vmem:[%s1 + $0x30] sm:$0xf]
  %v29 = vld [vmem:[%s1 + $0x34] sm:$0xf]
  %v30 = vld [vmem:[%s1 + $0x38] sm:$0xf]
  %v31 = vld [vmem:[%s1 + $0x3c] sm:$0xf]
  %v32 = vld [vmem:[%s1 + $0x40] sm:$0xf]
  %v33 = vld [vmem:[%s1 + $0x44] sm:$0xf]
  %v34 = vld [vmem:[%s1 + $0x48] sm:$0xf]
  %v35 = vld [vmem:[%s1 + $0x4c] sm:$0xf]
  %v36 = vld [vmem:[%s1 + $0x50] sm:$0xf]
  %v37 = vld [vmem:[%s1 + $0x54] sm:$0xf]
  %v38 = vld [vmem:[%s1 + $0x58] sm:$0xf]
  %v39 = vld [vmem:[%s1 + $0x5c] sm:$0xf]
  %v40 = vld [vmem:[%s2] sm:$0x1]
  %v42 = vperm.slane %v40, 0
  %v45 = vunpack.c.l.b16 %v15
  %v46 = vunpack.c.h.b16 %v15
  %v47 = vpack.c.b16 %v45, %v45
  %v48 = vpack.c.b16 %v46, %v46
  %v74 = vunpack.c.l.b16 %v16
  %v75 = vunpack.c.l.b16 %v17
  %v76 = vunpack.c.l.b16 %v18
  %v77 = vunpack.c.l.b16 %v19
  %v78 = vunpack.c.l.b16 %v20
  %v79 = vunpack.c.l.b16 %v21
  %v80 = vunpack.c.l.b16 %v22
  %v81 = vunpack.c.l.b16 %v23
  %v82 = vunpack.c.l.b16 %v24
  %v83 = vunpack.c.l.b16 %v25
  %v84 = vunpack.c.l.b16 %v26
  %v85 = vunpack.c.l.b16 %v27
  %v86 = vunpack.c.l.b16 %v28
  %v87 = vunpack.c.l.b16 %v29
  %v88 = vunpack.c.l.b16 %v30
  %v89 = vunpack.c.l.b16 %v31
  %v90 = vunpack.c.l.b16 %v32
  %v91 = vunpack.c.l.b16 %v33
  %v92 = vunpack.c.l.b16 %v34
  %v93 = vunpack.c.l.b16 %v35
  %v94 = vunpack.c.l.b16 %v36
  %v95 = vunpack.c.l.b16 %v37
  %v96 = vunpack.c.l.b16 %v38
  %v97 = vunpack.c.l.b16 %v39
  %v98 = vpack.c.b16 %v75, %v74
  %v99 = vpack.c.b16 %v77, %v76
  %v100 = vpack.c.b16 %v79, %v78
  %v101 = vpack.c.b16 %v81, %v80
  %v102 = vpack.c.b16 %v83, %v82
  %v103 = vpack.c.b16 %v85, %v84
  %v104 = vpack.c.b16 %v87, %v86
  %v105 = vpack.c.b16 %v89, %v88
  %v106 = vpack.c.b16 %v91, %v90
  %v107 = vpack.c.b16 %v93, %v92
  %v108 = vpack.c.b16 %v95, %v94
  %v109 = vpack.c.b16 %v97, %v96
  %vm122 = vcmask 523264
  %v124 = vsel %vm122, %v48, 0
  %126 = vmatpush.bf16.msra.mxu0 %v105
  %127 = vmatpush.bf16.msra.mxu0 %v104
  %128 = vmatpush.bf16.msra.mxu0 %v103
  %129 = vmatpush.bf16.msra.mxu0 %v102
  %130 = vmatpush.bf16.msra.mxu0 %v101
  %131 = vmatpush.bf16.msra.mxu0 %v100
  %132 = vmatpush.bf16.msra.mxu0 %v99
  %133 = vmatpush.bf16.msra.mxu0 %v98
  %134 = vmatmul.bf16.gmra.mxu0 %v47
  %v135 = vpop.f32.mrf.mxu0
  %v136 = vadd.f32 %v42, %v135
  %v137 = vpop.f32.mrf.mxu0
  %138 = vdwg.mxu0
  %139 = vmatpush.bf16.msra.mxu0 0
  %140 = vmatpush.bf16.msra.mxu0 0
  %141 = vmatpush.bf16.msra.mxu0 0
  %142 = vmatpush.bf16.msra.mxu0 0
  %143 = vmatpush.bf16.msra.mxu0 %v109
  %144 = vmatpush.bf16.msra.mxu0 %v108
  %145 = vmatpush.bf16.msra.mxu0 %v107
  %146 = vmatpush.bf16.msra.mxu0 %v106
  %147 = vmatmul.bf16.gmra.mxu0 %v124
  %v148 = vpop.f32.mrf.mxu0
  %v149 = vadd.f32 %v136, %v148
  %v150 = vpop.f32.mrf.mxu0
  %151 = vdwg.mxu0
  %152 = vst [vmem:[%s3] sm:$0xff] %v149
  // Predicated region
  $region14: #{_lambda_.3} parent=0 // pred_check
    _
  $region15: #{_lambda_.3} parent=0 // pred_check_branch
    %154 = sbr.rel (0) target = $region17
  $region16: #{_lambda_.3} parent=0 // pred_region
    _
  $region17: #{_lambda_.3} parent=0 // pred_fallthru
    _
  // Predicated region
  $region18: #{_lambda_.3} parent=0 // pred_check
    _
  $region19: #{_lambda_.3} parent=0 // pred_check_branch
    %156 = sbr.rel (0) target = $region21
  $region20: #{_lambda_.3} parent=0 // pred_region
    _
  $region21: #{_lambda_.3} parent=0 // pred_fallthru
    _

// kernel: _lambda_.5
$region0: #{_lambda_.5}
  #allocation0 [shape = 'u32[]', space=smem, size = 0x4, offset = 0x4, fixed_abs, tag = 'smem constant byte address 0x4 - core index']
  #allocation1 [shape = 'u32[72,128]{1,0:T(1,128)}', space=vmem, size = 0x9000, scoped, tag = 'internal scratch']
  %s0 = inlined_call_operand.vmem [shape: bf16[8,128], index: 0, kind: input, shape index: {}]
  %s1 = inlined_call_operand.vmem [shape: bf16[128,64], index: 1, kind: input, shape index: {}]
  %s2 = inlined_call_operand.vmem [shape: bf16[64,4], index: 2, kind: input, shape index: {}]
  %s3 = inlined_call_operand.vmem [shape: f32[1,4], index: 3, kind: input, shape index: {}]
  %s4 = inlined_call_operand.vmem [shape: f32[8,4], index: 4, kind: output, shape index: {}]
  %s5 = sld [smem:[#allocation0]]
  $region26: #{_lambda_.5} parent=0
    _
  %s7 = ssub.s32 1, %s5
  %s8 = scalar_select 0, %s7, %s5
  // Predicated region
  $region2: #{_lambda_.5} parent=0 // pred_check
    _
  $region3: #{_lambda_.5} parent=0 // pred_check_branch
    %10 = sbr.rel (0) target = $region5
  $region4: #{_lambda_.5} parent=0 // pred_region
    _
  $region5: #{_lambda_.5} parent=0 // pred_fallthru
    _
  // Predicated region
  $region6: #{_lambda_.5} parent=0 // pred_check
    _
  $region7: #{_lambda_.5} parent=0 // pred_check_branch
    %12 = sbr.rel (0) target = $region9
  $region8: #{_lambda_.5} parent=0 // pred_region
    _
  $region9: #{_lambda_.5} parent=0 // pred_fallthru
    _
  // Predicated region
  $region10: #{_lambda_.5} parent=0 // pred_check
    _
  $region11: #{_lambda_.5} parent=0 // pred_check_branch
    %14 = sbr.rel (0) target = $region13
  $region12: #{_lambda_.5} parent=0 // pred_region
    _
  $region13: #{_lambda_.5} parent=0 // pred_fallthru
    _
  // Predicated region
  $region14: #{_lambda_.5} parent=0 // pred_check
    _
  $region15: #{_lambda_.5} parent=0 // pred_check_branch
    %16 = sbr.rel (0) target = $region17
  $region16: #{_lambda_.5} parent=0 // pred_region
    _
  $region17: #{_lambda_.5} parent=0 // pred_fallthru
    _
  %v18 = vld [vmem:[%s0] sm:$0xf]
  %v19 = vld [vmem:[%s1] sm:$0xf]
  %v20 = vld [vmem:[%s1 + $0x4] sm:$0xf]
  %v21 = vld [vmem:[%s1 + $0x8] sm:$0xf]
  %v22 = vld [vmem:[%s1 + $0xc] sm:$0xf]
  %v23 = vld [vmem:[%s1 + $0x10] sm:$0xf]
  %v24 = vld [vmem:[%s1 + $0x14] sm:$0xf]
  %v25 = vld [vmem:[%s1 + $0x18] sm:$0xf]
  %v26 = vld [vmem:[%s1 + $0x1c] sm:$0xf]
  %v27 = vld [vmem:[%s1 + $0x20] sm:$0xf]
  %v28 = vld [vmem:[%s1 + $0x24] sm:$0xf]
  %v29 = vld [vmem:[%s1 + $0x28] sm:$0xf]
  %v30 = vld [vmem:[%s1 + $0x2c] sm:$0xf]
  %v31 = vld [vmem:[%s1 + $0x30] sm:$0xf]
  %v32 = vld [vmem:[%s1 + $0x34] sm:$0xf]
  %v33 = vld [vmem:[%s1 + $0x38] sm:$0xf]
  %v34 = vld [vmem:[%s1 + $0x3c] sm:$0xf]
  %v51 = vunpack.c.l.b16 %v19
  %v52 = vunpack.c.l.b16 %v20
  %v53 = vunpack.c.l.b16 %v21
  %v54 = vunpack.c.l.b16 %v22
  %v55 = vunpack.c.l.b16 %v23
  %v56 = vunpack.c.l.b16 %v24
  %v57 = vunpack.c.l.b16 %v25
  %v58 = vunpack.c.l.b16 %v26
  %v59 = vunpack.c.l.b16 %v27
  %v60 = vunpack.c.l.b16 %v28
  %v61 = vunpack.c.l.b16 %v29
  %v62 = vunpack.c.l.b16 %v30
  %v63 = vunpack.c.l.b16 %v31
  %v64 = vunpack.c.l.b16 %v32
  %v65 = vunpack.c.l.b16 %v33
  %v66 = vunpack.c.l.b16 %v34
  %v67 = vpack.c.b16 %v52, %v51
  %v68 = vpack.c.b16 %v54, %v53
  %v69 = vpack.c.b16 %v56, %v55
  %v70 = vpack.c.b16 %v58, %v57
  %v71 = vpack.c.b16 %v60, %v59
  %v72 = vpack.c.b16 %v62, %v61
  %v73 = vpack.c.b16 %v64, %v63
  %v74 = vpack.c.b16 %v66, %v65
  %83 = vmatpush.bf16.msra.mxu0 %v74
  %84 = vmatpush.bf16.msra.mxu0 %v73
  %85 = vmatpush.bf16.msra.mxu0 %v72
  %86 = vmatpush.bf16.msra.mxu0 %v71
  %87 = vmatpush.bf16.msra.mxu0 %v70
  %88 = vmatpush.bf16.msra.mxu0 %v69
  %89 = vmatpush.bf16.msra.mxu0 %v68
  %90 = vmatpush.bf16.msra.mxu0 %v67
  %91 = vmatmul.bf16.gmra.mxu0 %v18
  %v92 = vpop.f32.mrf.mxu0
  %v93 = vadd.f32 0.0, %v92
  %v94 = vpop.f32.mrf.mxu0
  %95 = vdwg.mxu0
  %v96 = vpack.c.bf16 %v93, %v93
  %v97 = vld [vmem:[%s2] sm:$0xf]
  %v98 = vld [vmem:[%s2 + $0x4] sm:$0xf]
  %v99 = vld [vmem:[%s2 + $0x8] sm:$0xf]
  %v100 = vld [vmem:[%s2 + $0xc] sm:$0xf]
  %v101 = vld [vmem:[%s2 + $0x10] sm:$0xf]
  %v102 = vld [vmem:[%s2 + $0x14] sm:$0xf]
  %v103 = vld [vmem:[%s2 + $0x18] sm:$0xf]
  %v104 = vld [vmem:[%s2 + $0x1c] sm:$0xf]
  %v105 = vld [vmem:[%s3] sm:$0x1]
  %v107 = vperm.slane %v105, 0
  %v117 = vunpack.c.l.b16 %v97
  %v118 = vunpack.c.l.b16 %v98
  %v119 = vunpack.c.l.b16 %v99
  %v120 = vunpack.c.l.b16 %v100
  %v121 = vunpack.c.l.b16 %v101
  %v122 = vunpack.c.l.b16 %v102
  %v123 = vunpack.c.l.b16 %v103
  %v124 = vunpack.c.l.b16 %v104
  %v125 = vpack.c.b16 %v118, %v117
  %v126 = vpack.c.b16 %v120, %v119
  %v127 = vpack.c.b16 %v122, %v121
  %v128 = vpack.c.b16 %v124, %v123
  %vm133 = vcmask 523264
  %v135 = vsel %vm133, %v96, 0
  %137 = vmatpush.bf16.msra.mxu0 0
  %138 = vmatpush.bf16.msra.mxu0 0
  %139 = vmatpush.bf16.msra.mxu0 0
  %140 = vmatpush.bf16.msra.mxu0 0
  %141 = vmatpush.bf16.msra.mxu0 %v128
  %142 = vmatpush.bf16.msra.mxu0 %v127
  %143 = vmatpush.bf16.msra.mxu0 %v126
  %144 = vmatpush.bf16.msra.mxu0 %v125
  %145 = vmatmul.bf16.gmra.mxu0 %v135
  %v146 = vpop.f32.mrf.mxu0
  %v147 = vadd.f32 %v107, %v146
  %v148 = vpop.f32.mrf.mxu0
  %149 = vdwg.mxu0
  %vm150 = vcmask 31744
  %151 = vst.msk [vmem:[%s4] sm:$0xff] %vm150, %v147
  // Predicated region
  $region18: #{_lambda_.5} parent=0 // pred_check
    _
  $region19: #{_lambda_.5} parent=0 // pred_check_branch
    %153 = sbr.rel (0) target = $region21
  $region20: #{_lambda_.5} parent=0 // pred_region
    _
  $region21: #{_lambda_.5} parent=0 // pred_fallthru
    _
  // Predicated region
  $region22: #{_lambda_.5} parent=0 // pred_check
    _
  $region23: #{_lambda_.5} parent=0 // pred_check_branch
    %155 = sbr.rel (0) target = $region25
  $region24: #{_lambda_.5} parent=0 // pred_region
    _
  $region25: #{_lambda_.5} parent=0 // pred_fallthru
    _

// kernel: _lambda_.4
$region0: #{_lambda_.4}
  #allocation0 [shape = 'u32[]', space=smem, size = 0x4, offset = 0x4, fixed_abs, tag = 'smem constant byte address 0x4 - core index']
  #allocation1 [shape = 'u32[72,128]{1,0:T(1,128)}', space=vmem, size = 0x9000, scoped, tag = 'internal scratch']
  %s0 = inlined_call_operand.vmem [shape: f32[2,8,128], index: 0, kind: input, shape index: {}]
  %s1 = inlined_call_operand.vmem [shape: f32[2,1,128], index: 1, kind: input, shape index: {}]
  %s2 = inlined_call_operand.vmem [shape: bf16[2,128,384], index: 2, kind: input, shape index: {}]
  %s3 = inlined_call_operand.hbm [shape: bf16[2,128,128], index: 3, kind: input, shape index: {}]
  %s4 = inlined_call_operand.vmem [shape: bf16[2,128,256], index: 4, kind: input, shape index: {}]
  %s5 = inlined_call_operand.hbm [shape: bf16[2,256,128], index: 5, kind: input, shape index: {}]
  %s6 = inlined_call_operand.vmem [shape: f32[2,16,128], index: 6, kind: input, shape index: {}]
  %s7 = inlined_call_operand.vmem [shape: f32[2,8,256], index: 7, kind: input, shape index: {}]
  %s8 = inlined_call_operand.vmem [shape: f32[2,8,128], index: 8, kind: output, shape index: {}]
  %s9 = sld [smem:[#allocation0]]
  $region81: #{_lambda_.4} parent=0
    _
  %s11 = ssub.s32 1, %s9
  %s12 = scalar_select 0, %s11, %s9
  $region1: #{_lambda_.4} parent=0
    #allocation2 [shape = 'u8[65536]{0}', space=vmem, size = 0x10000, scoped, tag = 'input window, operand 3']
    #allocation3 [shape = 's32[2]{0}', space=sflag, size = 0x8, scoped, tag = 'scoped memory for _lambda_.4']
    #allocation4 [shape = 'u8[131072]{0}', space=vmem, size = 0x20000, scoped, tag = 'input window, operand 5']
    #allocation5 [shape = 's32[2]{0}', space=sflag, size = 0x8, scoped, tag = 'scoped memory for _lambda_.4']
    %13 = vsyncpa [#allocation3], 0
    %s14 = scalar_lea.sflag [#allocation3], 1
    %15 = vsyncpa %s14, 0
    %16 = vsyncpa [#allocation5], 0
    %s17 = scalar_lea.sflag [#allocation5], 1
    %18 = vsyncpa %s17, 0
    loop: start=0, step=1, limit=10
    $region2: #{_lambda_.4} parent=1 // loop_pre_header
      _
    $region3: #{_lambda_.4} parent=1 // loop_header
      %s20 = sphi 0, %s24
      %p21 = scmp.ge.s32.totalorder %s20, 10
      %s27 = sphi 0, %s46
      %s28 = sphi 0, %s42
      %s29 = sphi 0, %s38
      %s30 = sphi 0, %s27
      %s31 = sphi 0, %s28
      %s32 = sphi 0, %s29
      %s33 = sphi 0, %s30
      %s34 = sphi 0, %s31
      %s35 = sphi 0, %s32
      %s49 = sphi 0, %s51
      %s52 = sphi 0, %s49
      %s53 = sphi 0, %s52
      %s69 = sphi 0, %s53
      %s75 = sphi 0, %s77
      %s78 = sphi 0, %s75
      %s79 = sphi 0, %s78
      %s95 = sphi 0, %s79
      %s101 = sphi 0, %s103
      %s104 = sphi 0, %s101
      %s105 = sphi 0, %s104
      %s121 = sphi 0, %s105
      %s127 = sphi 0, %s129
      %s130 = sphi 0, %s127
      %s131 = sphi 0, %s130
      %s147 = sphi 0, %s131
      %s153 = sphi 0, %s155
      %s156 = sphi 0, %s153
      %s157 = sphi 0, %s156
      %s173 = sphi 0, %s157
      %s179 = sphi 0, %s181
      %s182 = sphi 0, %s179
      %s183 = sphi 0, %s182
      %s199 = sphi 0, %s183
      %s205 = sphi 0, %s207
      %s208 = sphi 0, %s205
      %s209 = sphi 0, %s208
      %s225 = sphi 0, %s209
      %s231 = sphi 0, %s233
      %s234 = sphi 0, %s231
      %s235 = sphi 0, %s234
      %s251 = sphi 0, %s235
      %s257 = sphi 0, %s259
      %s260 = sphi 0, %s257
      %s261 = sphi 0, %s260
      %s277 = sphi 0, %s261
    $region4: #{_lambda_.4} parent=1 // loop_header_branch
      %23 = sbr.rel (%p21) target = $region8
    $region5: #{_lambda_.4} parent=1 // loop_body
      %s25 = ssub.s32 %s20, 1
      %s26 = ssub.s32 %s20, 2
      %s36 = sadd.s32 1, %s29
      %p37 = scmp.ge.s32.totalorder %s36, 2
      %s38 = scalar_select %p37, 0, %s36
      %s39 = sadd.s32 1, %s28
      %s40 = scalar_select %p37, %s39, %s28
      %p41 = scmp.ge.s32.totalorder %s40, 2
      %s42 = scalar_select %p41, 0, %s40
      %s43 = sadd.s32 1, %s27
      %s44 = scalar_select %p41, %s43, %s27
      %p45 = scmp.ge.s32.totalorder %s44, 2
      %s46 = scalar_select %p45, 0, %s44
      %s47 = ssub.s32 %s27, %s46
      %p48 = scmp.eq.s32.totalorder %s47, 0
      %s50 = sadd.s32 %s49, 1
      %s51 = scalar_select %p48, %s49, %s50
      %p54 = pneg %p48
      %p55 = scmp.eq.s32.totalorder %s20, 7
      %p56 = por %p54, %p55
      %p57 = scmp.ne.s32.totalorder %s49, %s52
      %p58 = scmp.eq.s32.totalorder %s20, 0
      %p59 = por %p57, %p58
      %p60 = scmp.ne.s32.totalorder %s49, %s52
      %p61 = scmp.eq.s32.totalorder %s25, 7
      %p62 = por %p60, %p61
      %p63 = scmp.ne.s32.totalorder %s52, %s53
      %p64 = scmp.eq.s32.totalorder %s25, 0
      %p65 = por %p63, %p64
      %p66 = scmp.ne.s32.totalorder %s52, %s53
      %p67 = scmp.eq.s32.totalorder %s26, 7
      %p68 = por %p66, %p67
      %p70 = scmp.ne.s32.totalorder %s53, %s69
      %p71 = scmp.eq.s32.totalorder %s26, 0
      %p72 = por %p70, %p71
      %s73 = ssub.s32 %s29, %s38
      %p74 = scmp.eq.s32.totalorder %s73, 0
      %s76 = sadd.s32 %s75, 1
      %s77 = scalar_select %p74, %s75, %s76
      %p80 = pneg %p74
      %p81 = scmp.eq.s32.totalorder %s20, 7
      %p82 = por %p80, %p81
      %p83 = scmp.ne.s32.totalorder %s75, %s78
      %p84 = scmp.eq.s32.totalorder %s20, 0
      %p85 = por %p83, %p84
      %p86 = scmp.ne.s32.totalorder %s75, %s78
      %p87 = scmp.eq.s32.totalorder %s25, 7
      %p88 = por %p86, %p87
      %p89 = scmp.ne.s32.totalorder %s78, %s79
      %p90 = scmp.eq.s32.totalorder %s25, 0
      %p91 = por %p89, %p90
      %p92 = scmp.ne.s32.totalorder %s78, %s79
      %p93 = scmp.eq.s32.totalorder %s26, 7
      %p94 = por %p92, %p93
      %p96 = scmp.ne.s32.totalorder %s79, %s95
      %p97 = scmp.eq.s32.totalorder %s26, 0
      %p98 = por %p96, %p97
      %s99 = ssub.s32 %s29, %s38
      %p100 = scmp.eq.s32.totalorder %s99, 0
      %s102 = sadd.s32 %s101, 1
      %s103 = scalar_select %p100, %s101, %s102
      %p106 = pneg %p100
      %p107 = scmp.eq.s32.totalorder %s20, 7
      %p108 = por %p106, %p107
      %p109 = scmp.ne.s32.totalorder %s101, %s104
      %p110 = scmp.eq.s32.totalorder %s20, 0
      %p111 = por %p109, %p110
      %p112 = scmp.ne.s32.totalorder %s101, %s104
      %p113 = scmp.eq.s32.totalorder %s25, 7
      %p114 = por %p112, %p113
      %p115 = scmp.ne.s32.totalorder %s104, %s105
      %p116 = scmp.eq.s32.totalorder %s25, 0
      %p117 = por %p115, %p116
      %p118 = scmp.ne.s32.totalorder %s104, %s105
      %p119 = scmp.eq.s32.totalorder %s26, 7
      %p120 = por %p118, %p119
      %p122 = scmp.ne.s32.totalorder %s105, %s121
      %p123 = scmp.eq.s32.totalorder %s26, 0
      %p124 = por %p122, %p123
      %s125 = ssub.s32 %s29, %s38
      %p126 = scmp.eq.s32.totalorder %s125, 0
      %s128 = sadd.s32 %s127, 1
      %s129 = scalar_select %p126, %s127, %s128
      %p132 = pneg %p126
      %p133 = scmp.eq.s32.totalorder %s20, 7
      %p134 = por %p132, %p133
      %p135 = scmp.ne.s32.totalorder %s127, %s130
      %p136 = scmp.eq.s32.totalorder %s20, 0
      %p137 = por %p135, %p136
      %p138 = scmp.ne.s32.totalorder %s127, %s130
      %p139 = scmp.eq.s32.totalorder %s25, 7
      %p140 = por %p138, %p139
      %p141 = scmp.ne.s32.totalorder %s130, %s131
      %p142 = scmp.eq.s32.totalorder %s25, 0
      %p143 = por %p141, %p142
      %p144 = scmp.ne.s32.totalorder %s130, %s131
      %p145 = scmp.eq.s32.totalorder %s26, 7
      %p146 = por %p144, %p145
      %p148 = scmp.ne.s32.totalorder %s131, %s147
      %p149 = scmp.eq.s32.totalorder %s26, 0
      %p150 = por %p148, %p149
      %s151 = ssub.s32 %s29, %s38
      %p152 = scmp.eq.s32.totalorder %s151, 0
      %s154 = sadd.s32 %s153, 1
      %s155 = scalar_select %p152, %s153, %s154
      %p158 = pneg %p152
      %p159 = scmp.eq.s32.totalorder %s20, 7
      %p160 = por %p158, %p159
      %p161 = scmp.ne.s32.totalorder %s153, %s156
      %p162 = scmp.eq.s32.totalorder %s20, 0
      %p163 = por %p161, %p162
      %p164 = scmp.ne.s32.totalorder %s153, %s156
      %p165 = scmp.eq.s32.totalorder %s25, 7
      %p166 = por %p164, %p165
      %p167 = scmp.ne.s32.totalorder %s156, %s157
      %p168 = scmp.eq.s32.totalorder %s25, 0
      %p169 = por %p167, %p168
      %p170 = scmp.ne.s32.totalorder %s156, %s157
      %p171 = scmp.eq.s32.totalorder %s26, 7
      %p172 = por %p170, %p171
      %p174 = scmp.ne.s32.totalorder %s157, %s173
      %p175 = scmp.eq.s32.totalorder %s26, 0
      %p176 = por %p174, %p175
      %s177 = ssub.s32 %s29, %s38
      %p178 = scmp.eq.s32.totalorder %s177, 0
      %s180 = sadd.s32 %s179, 1
      %s181 = scalar_select %p178, %s179, %s180
      %p184 = pneg %p178
      %p185 = scmp.eq.s32.totalorder %s20, 7
      %p186 = por %p184, %p185
      %p187 = scmp.ne.s32.totalorder %s179, %s182
      %p188 = scmp.eq.s32.totalorder %s20, 0
      %p189 = por %p187, %p188
      %p190 = scmp.ne.s32.totalorder %s179, %s182
      %p191 = scmp.eq.s32.totalorder %s25, 7
      %p192 = por %p190, %p191
      %p193 = scmp.ne.s32.totalorder %s182, %s183
      %p194 = scmp.eq.s32.totalorder %s25, 0
      %p195 = por %p193, %p194
      %p196 = scmp.ne.s32.totalorder %s182, %s183
      %p197 = scmp.eq.s32.totalorder %s26, 7
      %p198 = por %p196, %p197
      %p200 = scmp.ne.s32.totalorder %s183, %s199
      %p201 = scmp.eq.s32.totalorder %s26, 0
      %p202 = por %p200, %p201
      %s203 = ssub.s32 %s29, %s38
      %p204 = scmp.eq.s32.totalorder %s203, 0
      %s206 = sadd.s32 %s205, 1
      %s207 = scalar_select %p204, %s205, %s206
      %p210 = pneg %p204
      %p211 = scmp.eq.s32.totalorder %s20, 7
      %p212 = por %p210, %p211
      %p213 = scmp.ne.s32.totalorder %s205, %s208
      %p214 = scmp.eq.s32.totalorder %s20, 0
      %p215 = por %p213, %p214
      %p216 = scmp.ne.s32.totalorder %s205, %s208
      %p217 = scmp.eq.s32.totalorder %s25, 7
      %p218 = por %p216, %p217
      %p219 = scmp.ne.s32.totalorder %s208, %s209
      %p220 = scmp.eq.s32.totalorder %s25, 0
      %p221 = por %p219, %p220
      %p222 = scmp.ne.s32.totalorder %s208, %s209
      %p223 = scmp.eq.s32.totalorder %s26, 7
      %p224 = por %p222, %p223
      %p226 = scmp.ne.s32.totalorder %s209, %s225
      %p227 = scmp.eq.s32.totalorder %s26, 0
      %p228 = por %p226, %p227
      %s229 = ssub.s32 %s29, %s38
      %p230 = scmp.eq.s32.totalorder %s229, 0
      %s232 = sadd.s32 %s231, 1
      %s233 = scalar_select %p230, %s231, %s232
      %p236 = pneg %p230
      %p237 = scmp.eq.s32.totalorder %s20, 7
      %p238 = por %p236, %p237
      %p239 = scmp.ne.s32.totalorder %s231, %s234
      %p240 = scmp.eq.s32.totalorder %s20, 0
      %p241 = por %p239, %p240
      %p242 = scmp.ne.s32.totalorder %s231, %s234
      %p243 = scmp.eq.s32.totalorder %s25, 7
      %p244 = por %p242, %p243
      %p245 = scmp.ne.s32.totalorder %s234, %s235
      %p246 = scmp.eq.s32.totalorder %s25, 0
      %p247 = por %p245, %p246
      %p248 = scmp.ne.s32.totalorder %s234, %s235
      %p249 = scmp.eq.s32.totalorder %s26, 7
      %p250 = por %p248, %p249
      %p252 = scmp.ne.s32.totalorder %s235, %s251
      %p253 = scmp.eq.s32.totalorder %s26, 0
      %p254 = por %p252, %p253
      %s255 = ssub.s32 %s27, %s46
      %p256 = scmp.eq.s32.totalorder %s255, 0
      %s258 = sadd.s32 %s257, 1
      %s259 = scalar_select %p256, %s257, %s258
      %p262 = pneg %p256
      %p263 = scmp.eq.s32.totalorder %s20, 7
      %p264 = por %p262, %p263
      %p265 = scmp.ne.s32.totalorder %s257, %s260
      %p266 = scmp.eq.s32.totalorder %s20, 0
      %p267 = por %p265, %p266
      %p268 = scmp.ne.s32.totalorder %s257, %s260
      %p269 = scmp.eq.s32.totalorder %s25, 7
      %p270 = por %p268, %p269
      %p271 = scmp.ne.s32.totalorder %s260, %s261
      %p272 = scmp.eq.s32.totalorder %s25, 0
      %p273 = por %p271, %p272
      %p274 = scmp.ne.s32.totalorder %s260, %s261
      %p275 = scmp.eq.s32.totalorder %s26, 7
      %p276 = por %p274, %p275
      %p278 = scmp.ne.s32.totalorder %s261, %s277
      %p279 = scmp.eq.s32.totalorder %s26, 0
      %p280 = por %p278, %p279
      %p281 = scmp.le.s32.totalorder 1, %s20
      %p282 = scmp.lt.s32.totalorder %s20, 9
      %p283 = pnand %p281, %p282
      %p284 = pneg %p283
      // Predicated region
      $region9: #{_lambda_.4} parent=5 // pred_check
        _
      $region10: #{_lambda_.4} parent=5 // pred_check_branch
        %286 = sbr.rel (%p283) target = $region12
      $region11: #{_lambda_.4} parent=5 // pred_region
        %s287 = ssub.s32 %s20, 1
      $region12: #{_lambda_.4} parent=5 // pred_fallthru
        _
      %p288 = scmp.lt.s32.totalorder %s20, 8
      // Predicated region
      $region13: #{_lambda_.4} parent=5 // pred_check
        %p289 = pneg %p288
      $region14: #{_lambda_.4} parent=5 // pred_check_branch
        %291 = sbr.rel (%p289) target = $region16
      $region15: #{_lambda_.4} parent=5 // pred_region
        // Predicated region
        $region17: #{_lambda_.4} parent=15 // pred_check
          %p292 = pneg %p59
        $region18: #{_lambda_.4} parent=15 // pred_check_branch
          %294 = sbr.rel (%p292) target = $region20
        $region19: #{_lambda_.4} parent=15 // pred_region
          %p295 = scmp.lt.s32.totalorder %s27, 1
          %s296 = scalar_select %p295, %s27, 1
          %s297 = smul.addr %s296, 8
          %s298 = scalar_lea.vmem %s0, %s297
        $region20: #{_lambda_.4} parent=15 // pred_fallthru
          _
        // Predicated region
        $region21: #{_lambda_.4} parent=15 // pred_check
          %p299 = pneg %p85
        $region22: #{_lambda_.4} parent=15 // pred_check_branch
          %301 = sbr.rel (%p299) target = $region24
        $region23: #{_lambda_.4} parent=15 // pred_region
          %p302 = scmp.lt.s32.totalorder %s29, 1
          %s303 = scalar_select %p302, %s29, 1
          %s304 = scalar_lea.vmem %s1, %s303
        $region24: #{_lambda_.4} parent=15 // pred_fallthru
          _
        // Predicated region
        $region25: #{_lambda_.4} parent=15 // pred_check
          %p305 = pneg %p111
        $region26: #{_lambda_.4} parent=15 // pred_check_branch
          %307 = sbr.rel (%p305) target = $region28
        $region27: #{_lambda_.4} parent=15 // pred_region
          %p308 = scmp.lt.s32.totalorder %s29, 1
          %s309 = scalar_select %p308, %s29, 1
          %s310 = smul.addr %s309, 48
          %s311 = smul.addr %s310, 4
          %s312 = scalar_lea.vmem %s2, %s311
        $region28: #{_lambda_.4} parent=15 // pred_fallthru
          _
        // Predicated region
        $region29: #{_lambda_.4} parent=15 // pred_check
          %p313 = pneg %p137
        $region30: #{_lambda_.4} parent=15 // pred_check_branch
          %315 = sbr.rel (%p313) target = $region32
        $region31: #{_lambda_.4} parent=15 // pred_region
          %s316 = sand.u32 %s127, 1
          %s317 = scalar_lea.sflag [#allocation3], %s316
          %s318 = sand.u32 %s127, 1
          %s319 = smul.addr %s318, 64
          %s320 = scalar_lea.vmem [#allocation2], %s319
          %322 = vsyncadd %s317, 0
          %s323 = smul.addr %s29, 16
          %s324 = smul.addr %s323, 4
          %s325 = scalar_lea.hbm %s3, %s324
          %s326 = sshll.u32 %s325, 4
          %s327 = int_to_ptr.hbm [resolvable:$true] %s326
          %s328 = sshll.u32 %s320, 4
          %s329 = int_to_ptr.vmem [resolvable:$true] %s328
          %334 = dma.hbm_to_vmem [thread:$0]  %s327, 1024, %s329, %s317, 64, 64, 4
        $region32: #{_lambda_.4} parent=15 // pred_fallthru
          _
        // Predicated region
        $region33: #{_lambda_.4} parent=15 // pred_check
          %p335 = pneg %p163
        $region34: #{_lambda_.4} parent=15 // pred_check_branch
          %337 = sbr.rel (%p335) target = $region36
        $region35: #{_lambda_.4} parent=15 // pred_region
          %p338 = scmp.lt.s32.totalorder %s29, 1
          %s339 = scalar_select %p338, %s29, 1
          %s340 = smul.addr %s339, 32
          %s341 = smul.addr %s340, 4
          %s342 = scalar_lea.vmem %s4, %s341
        $region36: #{_lambda_.4} parent=15 // pred_fallthru
          _
        // Predicated region
        $region37: #{_lambda_.4} parent=15 // pred_check
          %p343 = pneg %p189
        $region38: #{_lambda_.4} parent=15 // pred_check_branch
          %345 = sbr.rel (%p343) target = $region40
        $region39: #{_lambda_.4} parent=15 // pred_region
          %s346 = sand.u32 %s179, 1
          %s347 = scalar_lea.sflag [#allocation5], %s346
          %s348 = sand.u32 %s179, 1
          %s349 = smul.addr %s348, 128
          %s350 = scalar_lea.vmem [#allocation4], %s349
          %352 = vsyncadd %s347, 0
          %s353 = smul.addr %s29, 32
          %s354 = smul.addr %s353, 4
          %s355 = scalar_lea.hbm %s5, %s354
          %s356 = sshll.u32 %s355, 4
          %s357 = int_to_ptr.hbm [resolvable:$true] %s356
          %s358 = sshll.u32 %s350, 4
          %s359 = int_to_ptr.vmem [resolvable:$true] %s358
          %364 = dma.hbm_to_vmem [thread:$0]  %s357, 2048, %s359, %s347, 64, 64, 4
        $region40: #{_lambda_.4} parent=15 // pred_fallthru
          _
        // Predicated region
        $region41: #{_lambda_.4} parent=15 // pred_check
          %p365 = pneg %p215
        $region42: #{_lambda_.4} parent=15 // pred_check_branch
          %367 = sbr.rel (%p365) target = $region44
        $region43: #{_lambda_.4} parent=15 // pred_region
          %p368 = scmp.lt.s32.totalorder %s29, 1
          %s369 = scalar_select %p368, %s29, 1
          %s370 = smul.addr %s369, 2
          %s371 = smul.addr %s370, 8
          %s372 = scalar_lea.vmem %s6, %s371
        $region44: #{_lambda_.4} parent=15 // pred_fallthru
          _
        // Predicated region
        $region45: #{_lambda_.4} parent=15 // pred_check
          %p373 = pneg %p241
        $region46: #{_lambda_.4} parent=15 // pred_check_branch
          %375 = sbr.rel (%p373) target = $region48
        $region47: #{_lambda_.4} parent=15 // pred_region
          %p376 = scmp.lt.s32.totalorder %s29, 1
          %s377 = scalar_select %p376, %s29, 1
          %s378 = smul.addr %s377, 2
          %s379 = smul.addr %s378, 8
          %s380 = scalar_lea.vmem %s7, %s379
        $region48: #{_lambda_.4} parent=15 // pred_fallthru
          _
      $region16: #{_lambda_.4} parent=5 // pred_fallthru
        _
      %p381 = scmp.le.s32.totalorder 1, %s20
      %p382 = scmp.lt.s32.totalorder %s20, 9
      %p383 = pnand %p381, %p382
      %p384 = pneg %p383
      // Predicated region
      $region49: #{_lambda_.4} parent=5 // pred_check
        _
      $region50: #{_lambda_.4} parent=5 // pred_check_branch
        %386 = sbr.rel (%p383) target = $region52
      $region51: #{_lambda_.4} parent=5 // pred_region
        %s387 = ssub.s32 %s20, 1
        %s388 = sand.u32 %s130, 1
        %s389 = scalar_lea.sflag [#allocation3], %s388
        %s390 = sand.u32 %s130, 1
        %s391 = smul.addr %s390, 64
        %s392 = scalar_lea.vmem [#allocation2], %s391
        // Predicated region
        $region53: #{_lambda_.4} parent=51 // pred_check
          %p393 = pneg %p143
        $region54: #{_lambda_.4} parent=51 // pred_check_branch
          %395 = sbr.rel (%p393) target = $region56
        $region55: #{_lambda_.4} parent=51 // pred_region
          %397 = dma.done %s389, 1024
        $region56: #{_lambda_.4} parent=51 // pred_fallthru
          _
        %s398 = sand.u32 %s182, 1
        %s399 = scalar_lea.sflag [#allocation5], %s398
        %s400 = sand.u32 %s182, 1
        %s401 = smul.addr %s400, 128
        %s402 = scalar_lea.vmem [#allocation4], %s401
        // Predicated region
        $region57: #{_lambda_.4} parent=51 // pred_check
          %p403 = pneg %p195
        $region58: #{_lambda_.4} parent=51 // pred_check_branch
          %405 = sbr.rel (%p403) target = $region60
        $region59: #{_lambda_.4} parent=51 // pred_region
          %407 = dma.done %s399, 2048
        $region60: #{_lambda_.4} parent=51 // pred_fallthru
          _
        %p408 = scmp.lt.s32.totalorder %s30, 1
        %s409 = scalar_select %p408, %s30, 1
        %s410 = smul.addr %s409, 8
        %s411 = scalar_lea.vmem %s0, %s410
        %p412 = pneg %p65
        %p413 = pneg %p62
        %p414 = scmp.lt.s32.totalorder %s32, 1
        %s415 = scalar_select %p414, %s32, 1
        %s416 = scalar_lea.vmem %s1, %s415
        %p417 = pneg %p91
        %p418 = pneg %p88
        %p419 = scmp.lt.s32.totalorder %s32, 1
        %s420 = scalar_select %p419, %s32, 1
        %s421 = smul.addr %s420, 48
        %s422 = smul.addr %s421, 4
        %s423 = scalar_lea.vmem %s2, %s422
        %p424 = pneg %p117
        %p425 = pneg %p114
        %s426 = sand.u32 %s130, 1
        %s427 = scalar_lea.sflag [#allocation3], %s426
        %s428 = sand.u32 %s130, 1
        %s429 = smul.addr %s428, 64
        %s430 = scalar_lea.vmem [#allocation2], %s429
        %p431 = pneg %p143
        %p432 = pneg %p140
        %p433 = scmp.lt.s32.totalorder %s32, 1
        %s434 = scalar_select %p433, %s32, 1
        %s435 = smul.addr %s434, 32
        %s436 = smul.addr %s435, 4
        %s437 = scalar_lea.vmem %s4, %s436
        %p438 = pneg %p169
        %p439 = pneg %p166
        %s440 = sand.u32 %s182, 1
        %s441 = scalar_lea.sflag [#allocation5], %s440
        %s442 = sand.u32 %s182, 1
        %s443 = smul.addr %s442, 128
        %s444 = scalar_lea.vmem [#allocation4], %s443
        %p445 = pneg %p195
        %p446 = pneg %p192
        %p447 = scmp.lt.s32.totalorder %s32, 1
        %s448 = scalar_select %p447, %s32, 1
        %s449 = smul.addr %s448, 2
        %s450 = smul.addr %s449, 8
        %s451 = scalar_lea.vmem %s6, %s450
        %p452 = pneg %p221
        %p453 = pneg %p218
        %p454 = scmp.lt.s32.totalorder %s32, 1
        %s455 = scalar_select %p454, %s32, 1
        %s456 = smul.addr %s455, 2
        %s457 = smul.addr %s456, 8
        %s458 = scalar_lea.vmem %s7, %s457
        %p459 = pneg %p247
        %p460 = pneg %p244
        %p461 = pneg %p273
        %p462 = pneg %p270
        %p463 = scmp.lt.s32.totalorder %s30, 1
        %s464 = scalar_select %p463, %s30, 1
        %s465 = smul.addr %s464, 8
        %s466 = scalar_lea.vmem %s8, %s465
        %p467 = scmp.lt.s32.totalorder %s30, 1
        %s468 = scalar_select %p467, %s30, 1
        %s469 = smul.addr %s468, 8
        %s470 = scalar_lea.vmem %s0, %s469
        %p471 = scmp.lt.s32.totalorder %s32, 1
        %s472 = scalar_select %p471, %s32, 1
        %s473 = scalar_lea.vmem %s1, %s472
        %p474 = scmp.lt.s32.totalorder %s32, 1
        %s475 = scalar_select %p474, %s32, 1
        %s476 = smul.addr %s475, 48
        %s477 = smul.addr %s476, 4
        %s478 = scalar_lea.vmem %s2, %s477
        %p479 = scmp.lt.s32.totalorder %s32, 1
        %s480 = scalar_select %p479, %s32, 1
        %s481 = smul.addr %s480, 32
        %s482 = smul.addr %s481, 4
        %s483 = scalar_lea.vmem %s4, %s482
        %p484 = scmp.lt.s32.totalorder %s32, 1
        %s485 = scalar_select %p484, %s32, 1
        %s486 = smul.addr %s485, 2
        %s487 = smul.addr %s486, 8
        %s488 = scalar_lea.vmem %s6, %s487
        %p489 = scmp.lt.s32.totalorder %s32, 1
        %s490 = scalar_select %p489, %s32, 1
        %s491 = smul.addr %s490, 2
        %s492 = smul.addr %s491, 8
        %s493 = scalar_lea.vmem %s7, %s492
        %p494 = scmp.lt.s32.totalorder %s30, 1
        %s495 = scalar_select %p494, %s30, 1
        %s496 = smul.addr %s495, 8
        %s497 = scalar_lea.vmem %s8, %s496
        %p499 = scmp.eq.s32.totalorder %s31, 0
        %p500 = scmp.eq.s32.totalorder %s32, 0
        %p501 = pnand %p499, %p500
        %p502 = pneg %p501
        // Predicated region
        $region61: #{_lambda_.4} parent=51 // pred_check
          _
        $region62: #{_lambda_.4} parent=51 // pred_check_branch
          %504 = sbr.rel (%p501) target = $region64
        $region63: #{_lambda_.4} parent=51 // pred_region
          %v505 = vld [vmem:[%s470] sm:$0xff]
          %506 = vst [vmem:[%s497] sm:$0xff] %v505
        $region64: #{_lambda_.4} parent=51 // pred_fallthru
          _
        %p507 = scmp.eq.s32.totalorder %s31, 1
        // Predicated region
        $region65: #{_lambda_.4} parent=51 // pred_check
          %p508 = pneg %p507
        $region66: #{_lambda_.4} parent=51 // pred_check_branch
          %510 = sbr.rel (%p508) target = $region68
        $region67: #{_lambda_.4} parent=51 // pred_region
          %v511 = vld [vmem:[%s473] sm:$0x1]
          %512 = vst [vmem:[%s497 + $0x5] sm:$0x1] %v511
        $region68: #{_lambda_.4} parent=51 // pred_fallthru
          _
        %s513 = sadd.s32 %s31, 5
        %v514 = vld [vmem:[%s497] sm:$0xff]
        %v515 = vld [vmem:[%s478] sm:$0xff]
        %v516 = vld [vmem:[%s478 + $0x8] sm:$0xf]
        %v517 = vld [vmem:[%s478 + $0xc] sm:$0xff]
        %v518 = vld [vmem:[%s478 + $0x14] sm:$0xf]
        %v519 = vld [vmem:[%s478 + $0x18] sm:$0xff]
        %v520 = vld [vmem:[%s478 + $0x20] sm:$0xf]
        %v521 = vld [vmem:[%s478 + $0x24] sm:$0xff]
        %v522 = vld [vmem:[%s478 + $0x2c] sm:$0xf]
        %v523 = vld [vmem:[%s478 + $0x30] sm:$0xff]
        %v524 = vld [vmem:[%s478 + $0x38] sm:$0xf]
        %v525 = vld [vmem:[%s478 + $0x3c] sm:$0xff]
        %v526 = vld [vmem:[%s478 + $0x44] sm:$0xf]
        %v527 = vld [vmem:[%s478 + $0x48] sm:$0xff]
        %v528 = vld [vmem:[%s478 + $0x50] sm:$0xf]
        %v529 = vld [vmem:[%s478 + $0x54] sm:$0xff]
        %v530 = vld [vmem:[%s478 + $0x5c] sm:$0xf]
        %v531 = vld [vmem:[%s478 + $0x60] sm:$0xff]
        %v532 = vld [vmem:[%s478 + $0x68] sm:$0xf]
        %v533 = vld [vmem:[%s478 + $0x6c] sm:$0xff]
        %v534 = vld [vmem:[%s478 + $0x74] sm:$0xf]
        %v535 = vld [vmem:[%s478 + $0x78] sm:$0xff]
        %v536 = vld [vmem:[%s478 + $0x80] sm:$0xf]
        %v537 = vld [vmem:[%s478 + $0x84] sm:$0xff]
        %v538 = vld [vmem:[%s478 + $0x8c] sm:$0xf]
        %v539 = vld [vmem:[%s478 + $0x90] sm:$0xff]
        %v540 = vld [vmem:[%s478 + $0x98] sm:$0xf]
        %v541 = vld [vmem:[%s478 + $0x9c] sm:$0xff]
        %v542 = vld [vmem:[%s478 + $0xa4] sm:$0xf]
        %v543 = vld [vmem:[%s478 + $0xa8] sm:$0xff]
        %v544 = vld [vmem:[%s478 + $0xb0] sm:$0xf]
        %v545 = vld [vmem:[%s478 + $0xb4] sm:$0xff]
        %v546 = vld [vmem:[%s478 + $0xbc] sm:$0xf]
        %v547 = vld [vmem:[%s392] sm:$0xf]
        %v548 = vld [vmem:[%s392 + $0x4] sm:$0xf]
        %v549 = vld [vmem:[%s392 + $0x8] sm:$0xf]
        %v550 = vld [vmem:[%s392 + $0xc] sm:$0xf]
        %v551 = vld [vmem:[%s392 + $0x10] sm:$0xf]
        %v552 = vld [vmem:[%s392 + $0x14] sm:$0xf]
        %v553 = vld [vmem:[%s392 + $0x18] sm:$0xf]
        %v554 = vld [vmem:[%s392 + $0x1c] sm:$0xf]
        %v555 = vld [vmem:[%s392 + $0x20] sm:$0xf]
        %v556 = vld [vmem:[%s392 + $0x24] sm:$0xf]
        %v557 = vld [vmem:[%s392 + $0x28] sm:$0xf]
        %v558 = vld [vmem:[%s392 + $0x2c] sm:$0xf]
        %v559 = vld [vmem:[%s392 + $0x30] sm:$0xf]
        %v560 = vld [vmem:[%s392 + $0x34] sm:$0xf]
        %v561 = vld [vmem:[%s392 + $0x38] sm:$0xf]
        %v562 = vld [vmem:[%s392 + $0x3c] sm:$0xf]
        %v563 = vld [vmem:[%s483] sm:$0xff]
        %v564 = vld [vmem:[%s483 + $0x8] sm:$0xff]
        %v565 = vld [vmem:[%s483 + $0x10] sm:$0xff]
        %v566 = vld [vmem:[%s483 + $0x18] sm:$0xff]
        %v567 = vld [vmem:[%s483 + $0x20] sm:$0xff]
        %v568 = vld [vmem:[%s483 + $0x28] sm:$0xff]
        %v569 = vld [vmem:[%s483 + $0x30] sm:$0xff]
        %v570 = vld [vmem:[%s483 + $0x38] sm:$0xff]
        %v571 = vld [vmem:[%s483 + $0x40] sm:$0xff]
        %v572 = vld [vmem:[%s483 + $0x48] sm:$0xff]
        %v573 = vld [vmem:[%s483 + $0x50] sm:$0xff]
        %v574 = vld [vmem:[%s483 + $0x58] sm:$0xff]
        %v575 = vld [vmem:[%s483 + $0x60] sm:$0xff]
        %v576 = vld [vmem:[%s483 + $0x68] sm:$0xff]
        %v577 = vld [vmem:[%s483 + $0x70] sm:$0xff]
        %v578 = vld [vmem:[%s483 + $0x78] sm:$0xff]
        %v579 = vld [vmem:[%s402] sm:$0xf]
        %v580 = vld [vmem:[%s402 + $0x4] sm:$0xf]
        %v581 = vld [vmem:[%s402 + $0x8] sm:$0xf]
        %v582 = vld [vmem:[%s402 + $0xc] sm:$0xf]
        %v583 = vld [vmem:[%s402 + $0x10] sm:$0xf]
        %v584 = vld [vmem:[%s402 + $0x14] sm:$0xf]
        %v585 = vld [vmem:[%s402 + $0x18] sm:$0xf]
        %v586 = vld [vmem:[%s402 + $0x1c] sm:$0xf]
        %v587 = vld [vmem:[%s402 + $0x20] sm:$0xf]
        %v588 = vld [vmem:[%s402 + $0x24] sm:$0xf]
        %v589 = vld [vmem:[%s402 + $0x28] sm:$0xf]
        %v590 = vld [vmem:[%s402 + $0x2c] sm:$0xf]
        %v591 = vld [vmem:[%s402 + $0x30] sm:$0xf]
        %v592 = vld [vmem:[%s402 + $0x34] sm:$0xf]
        %v593 = vld [vmem:[%s402 + $0x38] sm:$0xf]
        %v594 = vld [vmem:[%s402 + $0x3c] sm:$0xf]
        %v595 = vld [vmem:[%s402 + $0x40] sm:$0xf]
        %v596 = vld [vmem:[%s402 + $0x44] sm:$0xf]
        %v597 = vld [vmem:[%s402 + $0x48] sm:$0xf]
        %v598 = vld [vmem:[%s402 + $0x4c] sm:$0xf]
        %v599 = vld [vmem:[%s402 + $0x50] sm:$0xf]
        %v600 = vld [vmem:[%s402 + $0x54] sm:$0xf]
        %v601 = vld [vmem:[%s402 + $0x58] sm:$0xf]
        %v602 = vld [vmem:[%s402 + $0x5c] sm:$0xf]
        %v603 = vld [vmem:[%s402 + $0x60] sm:$0xf]
        %v604 = vld [vmem:[%s402 + $0x64] sm:$0xf]
        %v605 = vld [vmem:[%s402 + $0x68] sm:$0xf]
        %v606 = vld [vmem:[%s402 + $0x6c] sm:$0xf]
        %v607 = vld [vmem:[%s402 + $0x70] sm:$0xf]
        %v608 = vld [vmem:[%s402 + $0x74] sm:$0xf]
        %v609 = vld [vmem:[%s402 + $0x78] sm:$0xf]
        %v610 = vld [vmem:[%s402 + $0x7c] sm:$0xf]
        %v611 = vld [vmem:[%s488] sm:$0xff]
        %v612 = vld [vmem:[%s488 + $0x8] sm:$0xff]
        %v613 = vld [vmem:[%s493] sm:$0xff]
        %v614 = vld [vmem:[%s493 + $0x8] sm:$0xff]
        %615 = vadd.xlane.f32.xlu0 %v514
        %v616 = vpop.xlane.xlu0 %615
        %v617 = vrcp.pop 128.0
        %v618 = vmul.f32 128.0, %v617
        %v619 = vsub.f32 1.0, %v618
        %v620 = vmul.f32 %v617, %v619
        %v621 = vadd.f32 %v617, %v620
        %vm622 = vweird.f32 %v617
        %v623 = vsel %vm622, %v617, %v621
        %v624 = vmul.f32 %v616, %v623
        %v625 = vsub.f32 %v514, %v624
        %v626 = vmul.f32 %v625, %v625
        %627 = vadd.xlane.f32.xlu0 %v626
        %v628 = vpop.xlane.xlu0 %627
        %v629 = vmul.f32 %v628, %v623
        %v630 = vadd.f32 %v629, 1e-05
        %v631 = vrsqrt.pop %v630
        %v632 = vmul.f32 %v631, %v630
        %v633 = vmul.f32 %v632, %v631
        %v634 = vmul.f32 0.5, %v633
        %v635 = vsub.f32 1.5, %v634
        %v636 = vmul.f32 %v631, %v635
        %vm637 = vweird.f32 %v630
        %vm638 = vweird.f32 %v631
        %vm639 = vmor %vm637, %vm638
        %v640 = vsel %vm639, %v631, %v636
        %v641 = vmul.f32 %v625, %v640
        %v642 = vperm.slane %v611, 0
        %v643 = vmul.f32 %v641, %v642
        %v644 = vperm.slane %v611, 1
        %v645 = vadd.f32 %v643, %v644
        %v646 = vpack.c.bf16 %v645, %v645
        %v679 = vunpack.c.l.b16 %v515
        %v680 = vunpack.c.h.b16 %v515
        %v681 = vunpack.c.l.b16 %v516
        %v682 = vunpack.c.l.b16 %v517
        %v683 = vunpack.c.h.b16 %v517
        %v684 = vunpack.c.l.b16 %v518
        %v685 = vunpack.c.l.b16 %v519
        %v686 = vunpack.c.h.b16 %v519
        %v687 = vunpack.c.l.b16 %v520
        %v688 = vunpack.c.l.b16 %v521
        %v689 = vunpack.c.h.b16 %v521
        %v690 = vunpack.c.l.b16 %v522
        %v691 = vunpack.c.l.b16 %v523
        %v692 = vunpack.c.h.b16 %v523
        %v693 = vunpack.c.l.b16 %v524
        %v694 = vunpack.c.l.b16 %v525
        %v695 = vunpack.c.h.b16 %v525
        %v696 = vunpack.c.l.b16 %v526
        %v697 = vunpack.c.l.b16 %v527
        %v698 = vunpack.c.h.b16 %v527
        %v699 = vunpack.c.l.b16 %v528
        %v700 = vunpack.c.l.b16 %v529
        %v701 = vunpack.c.h.b16 %v529
        %v702 = vunpack.c.l.b16 %v530
        %v703 = vunpack.c.l.b16 %v531
        %v704 = vunpack.c.h.b16 %v531
        %v705 = vunpack.c.l.b16 %v532
        %v706 = vunpack.c.l.b16 %v533
        %v707 = vunpack.c.h.b16 %v533
        %v708 = vunpack.c.l.b16 %v534
        %v709 = vunpack.c.l.b16 %v535
        %v710 = vunpack.c.h.b16 %v535
        %v711 = vunpack.c.l.b16 %v536
        %v712 = vunpack.c.l.b16 %v537
        %v713 = vunpack.c.h.b16 %v537
        %v714 = vunpack.c.l.b16 %v538
        %v715 = vunpack.c.l.b16 %v539
        %v716 = vunpack.c.h.b16 %v539
        %v717 = vunpack.c.l.b16 %v540
        %v718 = vunpack.c.l.b16 %v541
        %v719 = vunpack.c.h.b16 %v541
        %v720 = vunpack.c.l.b16 %v542
        %v721 = vunpack.c.l.b16 %v543
        %v722 = vunpack.c.h.b16 %v543
        %v723 = vunpack.c.l.b16 %v544
        %v724 = vunpack.c.l.b16 %v545
        %v725 = vunpack.c.h.b16 %v545
        %v726 = vunpack.c.l.b16 %v546
        %v727 = vpack.c.b16 %v682, %v679
        %v728 = vpack.c.b16 %v683, %v680
        %v729 = vpack.c.b16 %v684, %v681
        %v730 = vpack.c.b16 %v688, %v685
        %v731 = vpack.c.b16 %v689, %v686
        %v732 = vpack.c.b16 %v690, %v687
        %v733 = vpack.c.b16 %v694, %v691
        %v734 = vpack.c.b16 %v695, %v692
        %v735 = vpack.c.b16 %v696, %v693
        %v736 = vpack.c.b16 %v700, %v697
        %v737 = vpack.c.b16 %v701, %v698
        %v738 = vpack.c.b16 %v702, %v699
        %v739 = vpack.c.b16 %v706, %v703
        %v740 = vpack.c.b16 %v707, %v704
        %v741 = vpack.c.b16 %v708, %v705
        %v742 = vpack.c.b16 %v712, %v709
        %v743 = vpack.c.b16 %v713, %v710
        %v744 = vpack.c.b16 %v714, %v711
        %v745 = vpack.c.b16 %v718, %v715
        %v746 = vpack.c.b16 %v719, %v716
        %v747 = vpack.c.b16 %v720, %v717
        %v748 = vpack.c.b16 %v724, %v721
        %v749 = vpack.c.b16 %v725, %v722
        %v750 = vpack.c.b16 %v726, %v723
        %775 = vmatpush.bf16.msra.mxu0 %v748
        %776 = vmatpush.bf16.msra.mxu0 %v745
        %777 = vmatpush.bf16.msra.mxu0 %v742
        %778 = vmatpush.bf16.msra.mxu0 %v739
        %779 = vmatpush.bf16.msra.mxu0 %v736
        %780 = vmatpush.bf16.msra.mxu0 %v733
        %781 = vmatpush.bf16.msra.mxu0 %v730
        %782 = vmatpush.bf16.msra.mxu0 %v727
        %783 = vmatmul.bf16.gmra.mxu0 %v646
        %v784 = vpop.f32.mrf.mxu0
        %v785 = vadd.f32 0.0, %v784
        %v786 = vpop.f32.mrf.mxu0
        %787 = vdwg.mxu0
        %788 = vmatpush.bf16.msra.mxu0 %v749
        %789 = vmatpush.bf16.msra.mxu0 %v746
        %790 = vmatpush.bf16.msra.mxu0 %v743
        %791 = vmatpush.bf16.msra.mxu0 %v740
        %792 = vmatpush.bf16.msra.mxu0 %v737
        %793 = vmatpush.bf16.msra.mxu0 %v734
        %794 = vmatpush.bf16.msra.mxu0 %v731
        %795 = vmatpush.bf16.msra.mxu0 %v728
        %796 = vmatmul.bf16.gmra.mxu0 %v646
        %v797 = vpop.f32.mrf.mxu0
        %v798 = vadd.f32 0.0, %v797
        %v799 = vpop.f32.mrf.mxu0
        %800 = vdwg.mxu0
        %801 = vmatpush.bf16.msra.mxu0 %v750
        %802 = vmatpush.bf16.msra.mxu0 %v747
        %803 = vmatpush.bf16.msra.mxu0 %v744
        %804 = vmatpush.bf16.msra.mxu0 %v741
        %805 = vmatpush.bf16.msra.mxu0 %v738
        %806 = vmatpush.bf16.msra.mxu0 %v735
        %807 = vmatpush.bf16.msra.mxu0 %v732
        %808 = vmatpush.bf16.msra.mxu0 %v729
        %809 = vmatmul.bf16.gmra.mxu0 %v646
        %v810 = vpop.f32.mrf.mxu0
        %v811 = vadd.f32 0.0, %v810
        %v812 = vpop.f32.mrf.mxu0
        %813 = vdwg.mxu0
        %v814 = vperm.slane %v611, 4
        %v815 = vadd.f32 %v785, %v814
        %v816 = vmul.f32 %v815, 0.17677669
        %v817 = vperm.slane %v611, 5
        %v818 = vadd.f32 %v798, %v817
        %v819 = vperm.slane %v611, 6
        %v820 = vadd.f32 %v811, %v819
        %822 = vrot.lane.b32.xlu0 %v816, 96
        %v823 = vpop.permute.xlu0 %822
        %825 = vrot.lane.b32.xlu0 %v816, 64
        %v826 = vpop.permute.xlu0 %825
        %828 = vrot.lane.b32.xlu0 %v816, 32
        %v829 = vpop.permute.xlu0 %828
        %v831 = vpack.c.bf16 %v816, %v816
        %v832 = vpack.c.bf16 %v823, %v823
        %v833 = vpack.c.bf16 %v826, %v826
        %v834 = vpack.c.bf16 %v829, %v829
        %836 = vrot.lane.b32.xlu0 %v818, 96
        %v837 = vpop.permute.xlu0 %836
        %839 = vrot.lane.b32.xlu0 %v818, 64
        %v840 = vpop.permute.xlu0 %839
        %842 = vrot.lane.b32.xlu0 %v818, 32
        %v843 = vpop.permute.xlu0 %842
        %v845 = vpack.c.bf16 %v818, %v818
        %v846 = vpack.c.bf16 %v837, %v837
        %v847 = vpack.c.bf16 %v840, %v840
        %v848 = vpack.c.bf16 %v843, %v843
        %850 = vrot.lane.b32.xlu0 %v820, 96
        %v851 = vpop.permute.xlu0 %850
        %853 = vrot.lane.b32.xlu0 %v820, 64
        %v854 = vpop.permute.xlu0 %853
        %856 = vrot.lane.b32.xlu0 %v820, 32
        %v857 = vpop.permute.xlu0 %856
        %v859 = vpack.c.bf16 %v820, %v820
        %v860 = vpack.c.bf16 %v851, %v851
        %v861 = vpack.c.bf16 %v854, %v854
        %v862 = vpack.c.bf16 %v857, %v857
        %vm863 = vcmask 261120
        %v865 = vsel %vm863, %v831, 0
        %v868 = vsel %vm863, %v845, 0
        %870 = vmatpush.bf16.xpose.msra.mxu0 0
        %871 = vmatpush.bf16.xpose.msra.mxu0 0
        %872 = vmatpush.bf16.xpose.msra.mxu0 0
        %873 = vmatpush.bf16.xpose.msra.mxu0 0
        %874 = vmatpush.bf16.xpose.msra.mxu0 0
        %875 = vmatpush.bf16.xpose.msra.mxu0 0
        %876 = vmatpush.bf16.xpose.msra.mxu0 0
        %877 = vmatpush.bf16.xpose.msra.mxu0 %v868
        %878 = vmatmul.bf16.gmra.mxu0 %v865
        %v879 = vpop.f32.mrf.mxu0
        %v880 = vadd.f32 0.0, %v879
        %v881 = vpop.f32.mrf.mxu0
        %882 = vdwg.mxu0
        %v884 = vsel %vm863, %v832, 0
        %v887 = vsel %vm863, %v846, 0
        %889 = vmatpush.bf16.xpose.msra.mxu0 0
        %890 = vmatpush.bf16.xpose.msra.mxu0 0
        %891 = vmatpush.bf16.xpose.msra.mxu0 0
        %892 = vmatpush.bf16.xpose.msra.mxu0 0
        %893 = vmatpush.bf16.xpose.msra.mxu0 0
        %894 = vmatpush.bf16.xpose.msra.mxu0 0
        %895 = vmatpush.bf16.xpose.msra.mxu0 0
        %896 = vmatpush.bf16.xpose.msra.mxu0 %v887
        %897 = vmatmul.bf16.gmra.mxu0 %v884
        %v898 = vpop.f32.mrf.mxu0
        %v899 = vadd.f32 0.0, %v898
        %v900 = vpop.f32.mrf.mxu0
        %901 = vdwg.mxu0
        %v903 = vsel %vm863, %v833, 0
        %v906 = vsel %vm863, %v847, 0
        %908 = vmatpush.bf16.xpose.msra.mxu0 0
        %909 = vmatpush.bf16.xpose.msra.mxu0 0
        %910 = vmatpush.bf16.xpose.msra.mxu0 0
        %911 = vmatpush.bf16.xpose.msra.mxu0 0
        %912 = vmatpush.bf16.xpose.msra.mxu0 0
        %913 = vmatpush.bf16.xpose.msra.mxu0 0
        %914 = vmatpush.bf16.xpose.msra.mxu0 0
        %915 = vmatpush.bf16.xpose.msra.mxu0 %v906
        %916 = vmatmul.bf16.gmra.mxu0 %v903
        %v917 = vpop.f32.mrf.mxu0
        %v918 = vadd.f32 0.0, %v917
        %v919 = vpop.f32.mrf.mxu0
        %920 = vdwg.mxu0
        %v922 = vsel %vm863, %v834, 0
        %v925 = vsel %vm863, %v848, 0
        %927 = vmatpush.bf16.xpose.msra.mxu0 0
        %928 = vmatpush.bf16.xpose.msra.mxu0 0
        %929 = vmatpush.bf16.xpose.msra.mxu0 0
        %930 = vmatpush.bf16.xpose.msra.mxu0 0
        %931 = vmatpush.bf16.xpose.msra.mxu0 0
        %932 = vmatpush.bf16.xpose.msra.mxu0 0
        %933 = vmatpush.bf16.xpose.msra.mxu0 0
        %934 = vmatpush.bf16.xpose.msra.mxu0 %v925
        %935 = vmatmul.bf16.gmra.mxu0 %v922
        %v936 = vpop.f32.mrf.mxu0
        %v937 = vadd.f32 0.0, %v936
        %v938 = vpop.f32.mrf.mxu0
        %939 = vdwg.mxu0
        %v940 = vlaneseq
        %v941 = vand.u32 %v940, 127
        %v942 = vstv %s513
        %vm943 = vcmp.lt.s32.totalorder %v941, %v942
        %v944 = vsel %vm943, %v880, -1e+30
        %v945 = vsel %vm943, %v899, -1e+30
        %v946 = vsel %vm943, %v918, -1e+30
        %v947 = vsel %vm943, %v937, -1e+30
        %vm948 = vcmask 64512
        %v949 = vsel %vm948, %v944, -inf
        %950 = vmax.xlane.f32.xlu0 %v949
        %v951 = vpop.xlane.xlu0 %950
        %v952 = vsel %vm948, %v945, -inf
        %953 = vmax.xlane.f32.xlu0 %v952
        %v954 = vpop.xlane.xlu0 %953
        %v955 = vsel %vm948, %v946, -inf
        %956 = vmax.xlane.f32.xlu0 %v955
        %v957 = vpop.xlane.xlu0 %956
        %v958 = vsel %vm948, %v947, -inf
        %959 = vmax.xlane.f32.xlu0 %v958
        %v960 = vpop.xlane.xlu0 %959
        %v961 = vsub.f32 %v944, %v951
        %v962 = vsub.f32 %v945, %v954
        %v963 = vsub.f32 %v946, %v957
        %v964 = vsub.f32 %v947, %v960
        %v965 = vmul.f32 %v961, 1.442695
        %v966 = vpow.pop %v965
        %v967 = vmul.f32 %v962, 1.442695
        %v968 = vpow.pop %v967
        %v969 = vmul.f32 %v963, 1.442695
        %v970 = vpow.pop %v969
        %v971 = vmul.f32 %v964, 1.442695
        %v972 = vpow.pop %v971
        %v973 = vsel %vm948, %v966, 0.0
        %974 = vadd.xlane.f32.xlu0 %v973
        %v975 = vpop.xlane.xlu0 %974
        %v976 = vsel %vm948, %v968, 0.0
        %977 = vadd.xlane.f32.xlu0 %v976
        %v978 = vpop.xlane.xlu0 %977
        %v979 = vsel %vm948, %v970, 0.0
        %980 = vadd.xlane.f32.xlu0 %v979
        %v981 = vpop.xlane.xlu0 %980
        %v982 = vsel %vm948, %v972, 0.0
        %983 = vadd.xlane.f32.xlu0 %v982
        %v984 = vpop.xlane.xlu0 %983
        %v985 = vrcp.pop %v975
        %v986 = vrcp.pop %v978
        %v987 = vrcp.pop %v981
        %v988 = vrcp.pop %v984
        %v989 = vmul.f32 %v966, %v985
        %v990 = vmul.f32 %v968, %v986
        %v991 = vmul.f32 %v970, %v987
        %v992 = vmul.f32 %v972, %v988
        %v993 = vpack.c.bf16 %v989, %v989
        %v994 = vpack.c.bf16 %v990, %v990
        %v995 = vpack.c.bf16 %v991, %v991
        %v996 = vpack.c.bf16 %v992, %v992
        %v998 = vsel %vm948, %v993, 0
        %vm1000 = vcmask 1043456
        %v1002 = vsel %vm1000, %v859, 0
        %1004 = vmatpush.bf16.msra.mxu0 0
        %1005 = vmatpush.bf16.msra.mxu0 0
        %1006 = vmatpush.bf16.msra.mxu0 0
        %1007 = vmatpush.bf16.msra.mxu0 0
        %1008 = vmatpush.bf16.msra.mxu0 0
        %1009 = vmatpush.bf16.msra.mxu0 0
        %1010 = vmatpush.bf16.msra.mxu0 0
        %1011 = vmatpush.bf16.msra.mxu0 %v1002
        %1012 = vmatmul.bf16.gmra.mxu0 %v998
        %v1013 = vpop.f32.mrf.mxu0
        %v1014 = vadd.f32 0.0, %v1013
        %v1015 = vpop.f32.mrf.mxu0
        %1016 = vdwg.mxu0
        %v1018 = vsel %vm948, %v994, 0
        %v1021 = vsel %vm1000, %v860, 0
        %1023 = vmatpush.bf16.msra.mxu0 0
        %1024 = vmatpush.bf16.msra.mxu0 0
        %1025 = vmatpush.bf16.msra.mxu0 0
        %1026 = vmatpush.bf16.msra.mxu0 0
        %1027 = vmatpush.bf16.msra.mxu0 0
        %1028 = vmatpush.bf16.msra.mxu0 0
        %1029 = vmatpush.bf16.msra.mxu0 0
        %1030 = vmatpush.bf16.msra.mxu0 %v1021
        %1031 = vmatmul.bf16.gmra.mxu0 %v1018
        %v1032 = vpop.f32.mrf.mxu0
        %v1033 = vadd.f32 0.0, %v1032
        %v1034 = vpop.f32.mrf.mxu0
        %1035 = vdwg.mxu0
        %v1037 = vsel %vm948, %v995, 0
        %v1040 = vsel %vm1000, %v861, 0
        %1042 = vmatpush.bf16.msra.mxu0 0
        %1043 = vmatpush.bf16.msra.mxu0 0
        %1044 = vmatpush.bf16.msra.mxu0 0
        %1045 = vmatpush.bf16.msra.mxu0 0
        %1046 = vmatpush.bf16.msra.mxu0 0
        %1047 = vmatpush.bf16.msra.mxu0 0
        %1048 = vmatpush.bf16.msra.mxu0 0
        %1049 = vmatpush.bf16.msra.mxu0 %v1040
        %1050 = vmatmul.bf16.gmra.mxu0 %v1037
        %v1051 = vpop.f32.mrf.mxu0
        %v1052 = vadd.f32 0.0, %v1051
        %v1053 = vpop.f32.mrf.mxu0
        %1054 = vdwg.mxu0
        %v1056 = vsel %vm948, %v996, 0
        %v1059 = vsel %vm1000, %v862, 0
        %1061 = vmatpush.bf16.msra.mxu0 0
        %1062 = vmatpush.bf16.msra.mxu0 0
        %1063 = vmatpush.bf16.msra.mxu0 0
        %1064 = vmatpush.bf16.msra.mxu0 0
        %1065 = vmatpush.bf16.msra.mxu0 0
        %1066 = vmatpush.bf16.msra.mxu0 0
        %1067 = vmatpush.bf16.msra.mxu0 0
        %1068 = vmatpush.bf16.msra.mxu0 %v1059
        %1069 = vmatmul.bf16.gmra.mxu0 %v1056
        %v1070 = vpop.f32.mrf.mxu0
        %v1071 = vadd.f32 0.0, %v1070
        %v1072 = vpop.f32.mrf.mxu0
        %1073 = vdwg.mxu0
        %1075 = vrot.lane.b32.xlu0 %v1033, 32
        %v1076 = vpop.permute.xlu0 %1075
        %1079 = vrot.lane.b32.xlu0 %v1052, 64
        %v1080 = vpop.permute.xlu0 %1079
        %1083 = vrot.lane.b32.xlu0 %v1071, 96
        %v1084 = vpop.permute.xlu0 %1083
        %v1086 = vsel %vm863, %v1014, %v1076
        %vm1087 = vcmask 523264
        %v1088 = vsel %vm1087, %v1086, %v1080
        %vm1089 = vcmask 785408
        %v1090 = vsel %vm1089, %v1088, %v1084
        %v1091 = vpack.c.bf16 %v1090, %v1090
        %v1092 = vperm.slane %v611, 7
        %v1109 = vunpack.c.l.b16 %v547
        %v1110 = vunpack.c.l.b16 %v548
        %v1111 = vunpack.c.l.b16 %v549
        %v1112 = vunpack.c.l.b16 %v550
        %v1113 = vunpack.c.l.b16 %v551
        %v1114 = vunpack.c.l.b16 %v552
        %v1115 = vunpack.c.l.b16 %v553
        %v1116 = vunpack.c.l.b16 %v554
        %v1117 = vunpack.c.l.b16 %v555
        %v1118 = vunpack.c.l.b16 %v556
        %v1119 = vunpack.c.l.b16 %v557
        %v1120 = vunpack.c.l.b16 %v558
        %v1121 = vunpack.c.l.b16 %v559
        %v1122 = vunpack.c.l.b16 %v560
        %v1123 = vunpack.c.l.b16 %v561
        %v1124 = vunpack.c.l.b16 %v562
        %v1125 = vpack.c.b16 %v1110, %v1109
        %v1126 = vpack.c.b16 %v1112, %v1111
        %v1127 = vpack.c.b16 %v1114, %v1113
        %v1128 = vpack.c.b16 %v1116, %v1115
        %v1129 = vpack.c.b16 %v1118, %v1117
        %v1130 = vpack.c.b16 %v1120, %v1119
        %v1131 = vpack.c.b16 %v1122, %v1121
        %v1132 = vpack.c.b16 %v1124, %v1123
        %1141 = vmatpush.bf16.msra.mxu0 %v1132
        %1142 = vmatpush.bf16.msra.mxu0 %v1131
        %1143 = vmatpush.bf16.msra.mxu0 %v1130
        %1144 = vmatpush.bf16.msra.mxu0 %v1129
        %1145 = vmatpush.bf16.msra.mxu0 %v1128
        %1146 = vmatpush.bf16.msra.mxu0 %v1127
        %1147 = vmatpush.bf16.msra.mxu0 %v1126
        %1148 = vmatpush.bf16.msra.mxu0 %v1125
        %1149 = vmatmul.bf16.gmra.mxu0 %v1091
        %v1150 = vpop.f32.mrf.mxu0
        %v1151 = vadd.f32 %v1092, %v1150
        %v1152 = vpop.f32.mrf.mxu0
        %1153 = vdwg.mxu0
        %v1154 = vadd.f32 %v514, %v1151
        %1155 = vadd.xlane.f32.xlu0 %v1154
        %v1156 = vpop.xlane.xlu0 %1155
        %v1157 = vmul.f32 %v1156, %v623
        %v1158 = vsub.f32 %v1154, %v1157
        %v1159 = vmul.f32 %v1158, %v1158
        %1160 = vadd.xlane.f32.xlu0 %v1159
        %v1161 = vpop.xlane.xlu0 %1160
        %v1162 = vmul.f32 %v1161, %v623
        %v1163 = vadd.f32 %v1162, 1e-05
        %v1164 = vrsqrt.pop %v1163
        %v1165 = vmul.f32 %v1164, %v1163
        %v1166 = vmul.f32 %v1165, %v1164
        %v1167 = vmul.f32 0.5, %v1166
        %v1168 = vsub.f32 1.5, %v1167
        %v1169 = vmul.f32 %v1164, %v1168
        %vm1170 = vweird.f32 %v1163
        %vm1171 = vweird.f32 %v1164
        %vm1172 = vmor %vm1170, %vm1171
        %v1173 = vsel %vm1172, %v1164, %v1169
        %v1174 = vmul.f32 %v1158, %v1173
        %v1175 = vperm.slane %v611, 2
        %v1176 = vmul.f32 %v1174, %v1175
        %v1177 = vperm.slane %v611, 3
        %v1178 = vadd.f32 %v1176, %v1177
        %v1179 = vpack.c.bf16 %v1178, %v1178
        %v1180 = vperm.slane %v613, 0
        %v1181 = vperm.slane %v614, 0
        %v1198 = vunpack.c.l.b16 %v563
        %v1199 = vunpack.c.h.b16 %v563
        %v1200 = vunpack.c.l.b16 %v564
        %v1201 = vunpack.c.h.b16 %v564
        %v1202 = vunpack.c.l.b16 %v565
        %v1203 = vunpack.c.h.b16 %v565
        %v1204 = vunpack.c.l.b16 %v566
        %v1205 = vunpack.c.h.b16 %v566
        %v1206 = vunpack.c.l.b16 %v567
        %v1207 = vunpack.c.h.b16 %v567
        %v1208 = vunpack.c.l.b16 %v568
        %v1209 = vunpack.c.h.b16 %v568
        %v1210 = vunpack.c.l.b16 %v569
        %v1211 = vunpack.c.h.b16 %v569
        %v1212 = vunpack.c.l.b16 %v570
        %v1213 = vunpack.c.h.b16 %v570
        %v1214 = vunpack.c.l.b16 %v571
        %v1215 = vunpack.c.h.b16 %v571
        %v1216 = vunpack.c.l.b16 %v572
        %v1217 = vunpack.c.h.b16 %v572
        %v1218 = vunpack.c.l.b16 %v573
        %v1219 = vunpack.c.h.b16 %v573
        %v1220 = vunpack.c.l.b16 %v574
        %v1221 = vunpack.c.h.b16 %v574
        %v1222 = vunpack.c.l.b16 %v575
        %v1223 = vunpack.c.h.b16 %v575
        %v1224 = vunpack.c.l.b16 %v576
        %v1225 = vunpack.c.h.b16 %v576
        %v1226 = vunpack.c.l.b16 %v577
        %v1227 = vunpack.c.h.b16 %v577
        %v1228 = vunpack.c.l.b16 %v578
        %v1229 = vunpack.c.h.b16 %v578
        %v1230 = vpack.c.b16 %v1200, %v1198
        %v1231 = vpack.c.b16 %v1201, %v1199
        %v1232 = vpack.c.b16 %v1204, %v1202
        %v1233 = vpack.c.b16 %v1205, %v1203
        %v1234 = vpack.c.b16 %v1208, %v1206
        %v1235 = vpack.c.b16 %v1209, %v1207
        %v1236 = vpack.c.b16 %v1212, %v1210
        %v1237 = vpack.c.b16 %v1213, %v1211
        %v1238 = vpack.c.b16 %v1216, %v1214
        %v1239 = vpack.c.b16 %v1217, %v1215
        %v1240 = vpack.c.b16 %v1220, %v1218
        %v1241 = vpack.c.b16 %v1221, %v1219
        %v1242 = vpack.c.b16 %v1224, %v1222
        %v1243 = vpack.c.b16 %v1225, %v1223
        %v1244 = vpack.c.b16 %v1228, %v1226
        %v1245 = vpack.c.b16 %v1229, %v1227
        %1262 = vmatpush.bf16.msra.mxu0 %v1244
        %1263 = vmatpush.bf16.msra.mxu0 %v1242
        %1264 = vmatpush.bf16.msra.mxu0 %v1240
        %1265 = vmatpush.bf16.msra.mxu0 %v1238
        %1266 = vmatpush.bf16.msra.mxu0 %v1236
        %1267 = vmatpush.bf16.msra.mxu0 %v1234
        %1268 = vmatpush.bf16.msra.mxu0 %v1232
        %1269 = vmatpush.bf16.msra.mxu0 %v1230
        %1270 = vmatmul.bf16.gmra.mxu0 %v1179
        %v1271 = vpop.f32.mrf.mxu0
        %v1272 = vadd.f32 %v1180, %v1271
        %v1273 = vpop.f32.mrf.mxu0
        %1274 = vdwg.mxu0
        %1275 = vmatpush.bf16.msra.mxu0 %v1245
        %1276 = vmatpush.bf16.msra.mxu0 %v1243
        %1277 = vmatpush.bf16.msra.mxu0 %v1241
        %1278 = vmatpush.bf16.msra.mxu0 %v1239
        %1279 = vmatpush.bf16.msra.mxu0 %v1237
        %1280 = vmatpush.bf16.msra.mxu0 %v1235
        %1281 = vmatpush.bf16.msra.mxu0 %v1233
        %1282 = vmatpush.bf16.msra.mxu0 %v1231
        %1283 = vmatmul.bf16.gmra.mxu0 %v1179
        %v1284 = vpop.f32.mrf.mxu0
        %v1285 = vadd.f32 %v1181, %v1284
        %v1286 = vpop.f32.mrf.mxu0
        %1287 = vdwg.mxu0
        %v1288 = vmul.f32 %v1272, 1.702
        %v1289 = vmul.f32 %v1285, 1.702
        %v1290 = vxor.u32 %v1288, 2147483648
        %v1291 = vxor.u32 %v1289, 2147483648
        %v1292 = vmul.f32 %v1290, 1.442695
        %v1293 = vpow.pop %v1292
        %v1294 = vmul.f32 %v1291, 1.442695
        %v1295 = vpow.pop %v1294
        %v1296 = vadd.f32 %v1293, 1.0
        %v1297 = vadd.f32 %v1295, 1.0
        %v1298 = vrcp.pop %v1296
        %v1299 = vmul.f32 %v1296, %v1298
        %v1300 = vsub.f32 1.0, %v1299
        %v1301 = vmul.f32 %v1298, %v1300
        %v1302 = vadd.f32 %v1298, %v1301
        %vm1303 = vweird.f32 %v1296
        %vm1304 = vweird.f32 %v1298
        %vm1305 = vmor %vm1303, %vm1304
        %v1306 = vsel %vm1305, %v1298, %v1302
        %v1307 = vand.u32 2147483647, %v1296
        %vm1308 = vcmp.eq.f32.partialorder %v1307, 8.507059e+37
        %v1309 = vand.u32 %v1296, 2147483648
        %v1310 = vor.u32 1.1754944e-38, %v1309
        %v1311 = vsel %vm1308, %v1310, %v1306
        %v1312 = vmul.f32 1.0, %v1311
        %v1313 = vrcp.pop %v1297
        %v1314 = vmul.f32 %v1297, %v1313
        %v1315 = vsub.f32 1.0, %v1314
        %v1316 = vmul.f32 %v1313, %v1315
        %v1317 = vadd.f32 %v1313, %v1316
        %vm1318 = vweird.f32 %v1297
        %vm1319 = vweird.f32 %v1313
        %vm1320 = vmor %vm1318, %vm1319
        %v1321 = vsel %vm1320, %v1313, %v1317
        %v1322 = vand.u32 2147483647, %v1297
        %vm1323 = vcmp.eq.f32.partialorder %v1322, 8.507059e+37
        %v1324 = vand.u32 %v1297, 2147483648
        %v1325 = vor.u32 1.1754944e-38, %v1324
        %v1326 = vsel %vm1323, %v1325, %v1321
        %v1327 = vmul.f32 1.0, %v1326
        %v1328 = vmul.f32 %v1272, %v1312
        %v1329 = vmul.f32 %v1285, %v1327
        %v1330 = vpack.c.bf16 %v1328, %v1328
        %v1331 = vpack.c.bf16 %v1329, %v1329
        %v1332 = vperm.slane %v612, 0
        %v1365 = vunpack.c.l.b16 %v579
        %v1366 = vunpack.c.l.b16 %v580
        %v1367 = vunpack.c.l.b16 %v581
        %v1368 = vunpack.c.l.b16 %v582
        %v1369 = vunpack.c.l.b16 %v583
        %v1370 = vunpack.c.l.b16 %v584
        %v1371 = vunpack.c.l.b16 %v585
        %v1372 = vunpack.c.l.b16 %v586
        %v1373 = vunpack.c.l.b16 %v587
        %v1374 = vunpack.c.l.b16 %v588
        %v1375 = vunpack.c.l.b16 %v589
        %v1376 = vunpack.c.l.b16 %v590
        %v1377 = vunpack.c.l.b16 %v591
        %v1378 = vunpack.c.l.b16 %v592
        %v1379 = vunpack.c.l.b16 %v593
        %v1380 = vunpack.c.l.b16 %v594
        %v1381 = vunpack.c.l.b16 %v595
        %v1382 = vunpack.c.l.b16 %v596
        %v1383 = vunpack.c.l.b16 %v597
        %v1384 = vunpack.c.l.b16 %v598
        %v1385 = vunpack.c.l.b16 %v599
        %v1386 = vunpack.c.l.b16 %v600
        %v1387 = vunpack.c.l.b16 %v601
        %v1388 = vunpack.c.l.b16 %v602
        %v1389 = vunpack.c.l.b16 %v603
        %v1390 = vunpack.c.l.b16 %v604
        %v1391 = vunpack.c.l.b16 %v605
        %v1392 = vunpack.c.l.b16 %v606
        %v1393 = vunpack.c.l.b16 %v607
        %v1394 = vunpack.c.l.b16 %v608
        %v1395 = vunpack.c.l.b16 %v609
        %v1396 = vunpack.c.l.b16 %v610
        %v1397 = vpack.c.b16 %v1366, %v1365
        %v1398 = vpack.c.b16 %v1368, %v1367
        %v1399 = vpack.c.b16 %v1370, %v1369
        %v1400 = vpack.c.b16 %v1372, %v1371
        %v1401 = vpack.c.b16 %v1374, %v1373
        %v1402 = vpack.c.b16 %v1376, %v1375
        %v1403 = vpack.c.b16 %v1378, %v1377
        %v1404 = vpack.c.b16 %v1380, %v1379
        %v1405 = vpack.c.b16 %v1382, %v1381
        %v1406 = vpack.c.b16 %v1384, %v1383
        %v1407 = vpack.c.b16 %v1386, %v1385
        %v1408 = vpack.c.b16 %v1388, %v1387
        %v1409 = vpack.c.b16 %v1390, %v1389
        %v1410 = vpack.c.b16 %v1392, %v1391
        %v1411 = vpack.c.b16 %v1394, %v1393
        %v1412 = vpack.c.b16 %v1396, %v1395
        %1429 = vmatpush.bf16.msra.mxu0 %v1404
        %1430 = vmatpush.bf16.msra.mxu0 %v1403
        %1431 = vmatpush.bf16.msra.mxu0 %v1402
        %1432 = vmatpush.bf16.msra.mxu0 %v1401
        %1433 = vmatpush.bf16.msra.mxu0 %v1400
        %1434 = vmatpush.bf16.msra.mxu0 %v1399
        %1435 = vmatpush.bf16.msra.mxu0 %v1398
        %1436 = vmatpush.bf16.msra.mxu0 %v1397
        %1437 = vmatmul.bf16.gmra.mxu0 %v1330
        %v1438 = vpop.f32.mrf.mxu0
        %v1439 = vadd.f32 %v1332, %v1438
        %v1440 = vpop.f32.mrf.mxu0
        %1441 = vdwg.mxu0
        %1442 = vmatpush.bf16.msra.mxu0 %v1412
        %1443 = vmatpush.bf16.msra.mxu0 %v1411
        %1444 = vmatpush.bf16.msra.mxu0 %v1410
        %1445 = vmatpush.bf16.msra.mxu0 %v1409
        %1446 = vmatpush.bf16.msra.mxu0 %v1408
        %1447 = vmatpush.bf16.msra.mxu0 %v1407
        %1448 = vmatpush.bf16.msra.mxu0 %v1406
        %1449 = vmatpush.bf16.msra.mxu0 %v1405
        %1450 = vmatmul.bf16.gmra.mxu0 %v1331
        %v1451 = vpop.f32.mrf.mxu0
        %v1452 = vadd.f32 %v1439, %v1451
        %v1453 = vpop.f32.mrf.mxu0
        %1454 = vdwg.mxu0
        %v1455 = vadd.f32 %v1154, %v1452
        %v1456 = vlaneseq
        %v1457 = vshrl.u32 %v1456, 7
        %vm1458 = vcmp.lt.s32.totalorder %v1457, %v942
        %v1459 = vsel %vm1458, 1, 0
        %vm1460 = vcmp.eq.s32.totalorder %v1459, 1
        %v1461 = vsel %vm1460, %v1455, 0.0
        %1462 = vst [vmem:[%s497] sm:$0xff] %v1461
        %p1463 = scmp.lt.s32.totalorder %s30, 1
        %s1464 = scalar_select %p1463, %s30, 1
        %s1465 = smul.addr %s1464, 8
        %s1466 = scalar_lea.vmem %s8, %s1465
        // Predicated region
        $region69: #{_lambda_.4} parent=51 // pred_check
          %p1467 = pneg %p270
        $region70: #{_lambda_.4} parent=51 // pred_check_branch
          %1469 = sbr.rel (%p1467) target = $region72
        $region71: #{_lambda_.4} parent=51 // pred_region
          _
        $region72: #{_lambda_.4} parent=51 // pred_fallthru
          _
      $region52: #{_lambda_.4} parent=5 // pred_fallthru
        _
      %p1470 = scmp.le.s32.totalorder 2, %s20
      // Predicated region
      $region73: #{_lambda_.4} parent=5 // pred_check
        %p1471 = pneg %p1470
      $region74: #{_lambda_.4} parent=5 // pred_check_branch
        %1473 = sbr.rel (%p1471) target = $region76
      $region75: #{_lambda_.4} parent=5 // pred_region
        %s1474 = ssub.s32 %s20, 2
        // Predicated region
        $region77: #{_lambda_.4} parent=75 // pred_check
          %p1475 = pneg %p276
        $region78: #{_lambda_.4} parent=75 // pred_check_branch
          %1477 = sbr.rel (%p1475) target = $region80
        $region79: #{_lambda_.4} parent=75 // pred_region
          %p1478 = scmp.lt.s32.totalorder %s33, 1
          %s1479 = scalar_select %p1478, %s33, 1
          %s1480 = smul.addr %s1479, 8
          %s1481 = scalar_lea.vmem %s8, %s1480
        $region80: #{_lambda_.4} parent=75 // pred_fallthru
          _
      $region76: #{_lambda_.4} parent=5 // pred_fallthru
        _
    $region6: #{_lambda_.4} parent=1 // loop_footer
      %s24 = sadd.s32 1, %s20
    $region7: #{_lambda_.4} parent=1 // loop_footer_branch
      %19 = sbr.rel target = $region3
    $region8: #{_lambda_.4} parent=1 // loop_exit
      _
    %1482 = vsyncpa [#allocation3], 1
    %s1483 = scalar_lea.sflag [#allocation3], 1
    %1484 = vsyncpa %s1483, 1
    %1485 = vsyncpa [#allocation5], 1
    %s1486 = scalar_lea.sflag [#allocation5], 1
    %1487 = vsyncpa %s1486, 1

</llo_original>
